<compile_context>
chip_gen: v7x
topology: tpu7x:2x2x1
jax: 0.10.0
libtpu: 0.0.40
codegen_flags: <defaults>
</compile_context>

<pallas_src>
import jax
import jax.numpy as jnp
from jax import lax
from jax.experimental import pallas as pl
from jax.experimental.pallas import tpu as pltpu


# ---------------------------------------------------------------------------
# Kernel
# ---------------------------------------------------------------------------
def mlp_kernel(x_ref, w1_ref, b1_ref, w2_ref, b2_ref, w3_ref, b3_ref, o_ref):
    # x tile arrives batch-major (tile_b, in_dim) f32; bf16 cast happens here
    # (keeps the HBM stream at 4 B/elt with no extra wrapper pass).
    xb = x_ref[...].astype(jnp.bfloat16)
    # Linear 1 + ReLU, feature-major result: contract w1 dim 1 with x dim 1
    # (trans-B form) -> (hid, tile_b); f32 accumulation on the MXU.
    h1 = lax.dot_general(w1_ref[...], xb, (((1,), (1,)), ((), ())),
                         preferred_element_type=jnp.float32)
    h1 = jnp.maximum(h1 + b1_ref[...], 0.0)
    # Linear 2 + ReLU: plain (in_dim, hid) @ (hid, tile_b) on the MXU.
    h2 = jnp.dot(w2_ref[...], h1.astype(jnp.bfloat16),
                 preferred_element_type=jnp.float32)
    h2 = jnp.maximum(h2 + b2_ref[...], 0.0)                 # (in_dim, tile_b)
    # Linear 3 (out_dim == 1): VPU multiply + sublane reduce -> lane-dense
    # (1, tile_b) output row; no MXU matvec, no relayout before the store.
    z = jnp.sum(w3_ref[...] * h2, axis=0, keepdims=True) + b3_ref[...]
    o_ref[...] = jax.nn.sigmoid(z).astype(o_ref.dtype)


# ---------------------------------------------------------------------------
# Tiling / device heuristics
# ---------------------------------------------------------------------------
def _round_up(x, m):
    return -(-x // m) * m


def _device_config():
    kind = ""
    try:
        kind = jax.devices()[0].device_kind.lower()
    except Exception:
        pass
    is_v7 = "v7" in kind
    two_cores = is_v7                                  # v7x: 2 TensorCores/chip
    # v7x: 64 MiB physical VMEM per TC -> keep the 32 MiB scoped default.
    # v5e/v6e: 128 MiB physical -> safe to raise to 64 MiB.
    vmem_limit = (32 << 20) if is_v7 else (64 << 20)
    return two_cores, vmem_limit


def _vmem_tile_bytes(tile_b, in_dim, hid):
    # x f32 double-buffered + in-kernel bf16 copy.
    x_stream = 2 * tile_b * in_dim * 4 + tile_b * in_dim * 2
    # h1 (f32 + bf16 copy) and h2 (f32) intermediates materialized in VMEM.
    inter = hid * tile_b * (4 + 2) + in_dim * tile_b * 4
    out_stream = 2 * tile_b * 4
    weights = 64 * 1024
    return x_stream + inter + out_stream + weights


def _choose_tiling(n, in_dim, hid, two_cores, vmem_limit):
    """Pick (tile_b, padded_n): biggest VMEM-fitting tile, fewest grid steps;
    on 2-TC chips keep >= 2 steps so the parallel grid axis splits work."""
    budget = vmem_limit // 2          # headroom for compiler scratch / spills
    n128 = _round_up(max(n, 1), 128)
    options = []
    for tb in (16384, 8192, 4096, 2048, 1024, 512, 256, 128):
        if _vmem_tile_bytes(tb, in_dim, hid) > budget:
            continue
        steps = -(-n128 // tb)
        n_pad = steps * tb
        # Never process more than ~1.5x the (128-rounded) real rows.
        if n_pad > max(int(1.5 * n128), 128):
            continue
        options.append((tb, steps, n_pad))
    if not options:
        steps = -(-n128 // 128)
        return 128, steps * 128
    if two_cores:
        multi = [o for o in options if o[1] >= 2]
        pool = multi if multi else options
        # Minimize per-core wall steps, prefer an even split, then least pad.
        tb, _, n_pad = min(pool, key=lambda o: (-(-o[1] // 2), o[1] % 2, o[2]))
    else:
        # Single TC: the grid is a serial loop -> fewest steps wins.
        tb, _, n_pad = min(options, key=lambda o: (o[1], o[2]))
    return tb, n_pad


# ---------------------------------------------------------------------------
# pallas_call builder + wrapper
# ---------------------------------------------------------------------------
def _const_spec(shape, single_buffer):
    idx = lambda i: (0, 0)
    if single_buffer:
        try:
            return pl.BlockSpec(shape, idx, pipeline_mode=pl.Buffered(1))
        except (AttributeError, TypeError):
            pass
    return pl.BlockSpec(shape, idx)


def _build_forward(n_pad, tile_b, in_dim, hid, vmem_limit, single_buffer_consts):
    grid = (n_pad // tile_b,)
    in_specs = [pl.BlockSpec((tile_b, in_dim), lambda i: (i, 0))]    # x tile
    for shp in ((hid, in_dim), (hid, 1), (in_dim, hid), (in_dim, 1),
                (in_dim, 1), (1, 1)):                                # w1..b3
        in_specs.append(_const_spec(shp, single_buffer_consts))
    return pl.pallas_call(
        mlp_kernel,
        out_shape=jax.ShapeDtypeStruct((1, n_pad), jnp.float32),
        grid_spec=pltpu.PrefetchScalarGridSpec(
            num_scalar_prefetch=0,
            grid=grid,
            in_specs=in_specs,
            out_specs=pl.BlockSpec((1, tile_b), lambda i: (0, i)),   # lane-dense
        ),
        compiler_params=pltpu.CompilerParams(
            dimension_semantics=("parallel",),   # megacore sharding on v7x
            vmem_limit_bytes=vmem_limit,
        ),
    )


def mlp_layer_forward(x, params, *, tile_b=None):
    """x: (N, in_dim) f32. Returns (N,) f32 (matches PyTorch .view(-1))."""
    w1, b1, w2, b2, w3, b3 = params
    n, in_dim = x.shape
    hid = w1.shape[0]                      # 2 * in_dim
    assert w1.shape == (hid, in_dim)

    two_cores, vmem_limit = _device_config()
    if tile_b is None:
        tile_b, n_pad = _choose_tiling(n, in_dim, hid, two_cores, vmem_limit)
    else:
        assert tile_b % 128 == 0
        n_pad = _round_up(n, tile_b)

    if n_pad != n:
        x = jnp.pad(x, ((0, n_pad - n), (0, 0)))   # zero-row tail, trimmed below

    args = (x, w1, b1, w2, b2, w3, b3)
    try:
        out = _build_forward(n_pad, tile_b, in_dim, hid, vmem_limit, True)(*args)
    except Exception:
        # Fallback if single-buffering (pl.Buffered(1)) of the constant weight
        # blocks is rejected by the installed JAX/Mosaic.
        out = _build_forward(n_pad, tile_b, in_dim, hid, vmem_limit, False)(*args)

    return out.reshape(-1)[:n]  # .view(-1), tail trim for padded batches


# ---------------------------------------------------------------------------
# Parameter init (matches the PyTorch module) + pure-JAX reference
# ---------------------------------------------------------------------------
def xavier_uniform(key, shape, fan_in, fan_out):
    bound = (6.0 / (fan_in + fan_out)) ** 0.5
    return jax.random.uniform(key, shape, jnp.float32, -bound, bound)


def default_bias(key, fan_in, shape):
    bound = 1.0 / (fan_in ** 0.5)
    return jax.random.uniform(key, shape, jnp.float32, -bound, bound)


def make_params(key, in_dim, out_dim=1):
    hid = in_dim * 2
    ks = jax.random.split(key, 6)
    # Weights stored in PyTorch (out_features, in_features) layout; w1/w2 bf16
    # (native MXU path), biases and the tiny w3/b3 stay f32.
    w1 = xavier_uniform(ks[0], (hid, in_dim), in_dim, hid).astype(jnp.bfloat16)
    b1 = default_bias(ks[1], in_dim, (hid, 1))
    w2 = xavier_uniform(ks[2], (in_dim, hid), hid, in_dim).astype(jnp.bfloat16)
    b2 = default_bias(ks[3], hid, (in_dim, 1))
    w3 = xavier_uniform(ks[4], (out_dim, in_dim), in_dim, out_dim).T  # (in_dim, 1)
    b3 = default_bias(ks[5], in_dim, (1, out_dim))                    # (1, 1)
    return (w1, b1, w2, b2, w3, b3)


def reference_forward(x, params):
    w1, b1, w2, b2, w3, b3 = params
    w1f = w1.astype(jnp.float32)
    w2f = w2.astype(jnp.float32)
    h1 = jnp.maximum(x @ w1f.T + b1.reshape(1, -1), 0.0)
    h2 = jnp.maximum(h1 @ w2f.T + b2.reshape(1, -1), 0.0)
    return jax.nn.sigmoid(h2 @ w3 + b3).reshape(-1)


if __name__ == "__main__":
    key = jax.random.PRNGKey(0)
    k_params, k_x = jax.random.split(key)

    N, in_dim = 512, 32
    params = make_params(k_params, in_dim, out_dim=1)
    x = jax.random.normal(k_x, (N, in_dim), dtype=jnp.float32)

    out = jax.block_until_ready(mlp_layer_forward(x, params))
    ref = reference_forward(x, params)
    assert out.shape == (N,)
    # bf16 MXU inputs (f32 accumulation) vs f32 reference -> relaxed tolerance.
    assert jnp.allclose(out, ref, atol=2e-2), "mismatch vs f32 reference"

    # Ragged batch exercises the pad-to-tile / trim path.
    N2 = 300
    x2 = x[:N2]
    out2 = jax.block_until_ready(mlp_layer_forward(x2, params))
    ref2 = reference_forward(x2, params)
    assert out2.shape == (N2,)
    assert jnp.allclose(out2, ref2, atol=2e-2), "mismatch vs f32 reference (ragged)"

    print("KERNEL_OK")
</pallas_src>

<mosaic_0001>
module attributes {stable_mosaic.version = 11 : i64} {
  func.func @mlp_kernel(%arg0: i32, %arg1: memref<512x32xf32, #tpu.memory_space<vmem>>, %arg2: memref<64x32xbf16, #tpu.memory_space<vmem>>, %arg3: memref<64x1xf32, #tpu.memory_space<vmem>>, %arg4: memref<32x64xbf16, #tpu.memory_space<vmem>>, %arg5: memref<32x1xf32, #tpu.memory_space<vmem>>, %arg6: memref<32x1xf32, #tpu.memory_space<vmem>>, %arg7: memref<1x1xf32, #tpu.memory_space<vmem>>, %arg8: memref<1x512xf32, #tpu.memory_space<vmem>>) attributes {dimension_semantics = [#tpu.dimension_semantics<parallel>], iteration_bounds = array<i64: 1>, scalar_prefetch = 0 : i64, scratch_operands = 0 : i64, tpu.core_type = #tpu.core_type<tc>, window_params = [{transform_indices = @transform_0, window_bounds = array<i64: 512, 32>}, {pipeline_mode = #tpu.pipeline_mode<synchronous>, transform_indices = @transform_1, window_bounds = array<i64: 64, 32>}, {pipeline_mode = #tpu.pipeline_mode<synchronous>, transform_indices = @transform_2, window_bounds = array<i64: 64, 1>}, {pipeline_mode = #tpu.pipeline_mode<synchronous>, transform_indices = @transform_3, window_bounds = array<i64: 32, 64>}, {pipeline_mode = #tpu.pipeline_mode<synchronous>, transform_indices = @transform_4, window_bounds = array<i64: 32, 1>}, {pipeline_mode = #tpu.pipeline_mode<synchronous>, transform_indices = @transform_5, window_bounds = array<i64: 32, 1>}, {pipeline_mode = #tpu.pipeline_mode<synchronous>, transform_indices = @transform_6, window_bounds = array<i64: 1, 1>}, {transform_indices = @transform_7, window_bounds = array<i64: 1, 512>}]} {
    %c0 = arith.constant 0 : index
    %c0_0 = arith.constant 0 : index
    %0 = vector.load %arg1[%c0, %c0_0] : memref<512x32xf32, #tpu.memory_space<vmem>>, vector<512x32xf32>
    %1 = arith.truncf %0 : vector<512x32xf32> to vector<512x32xbf16>
    %c0_1 = arith.constant 0 : index
    %c0_2 = arith.constant 0 : index
    %2 = vector.load %arg2[%c0_1, %c0_2] : memref<64x32xbf16, #tpu.memory_space<vmem>>, vector<64x32xbf16>
    %cst = arith.constant dense<0.000000e+00> : vector<64x512xf32>
    %3 = tpu.matmul %2, %1, %cst {dimension_numbers = #tpu.dot_dimension_numbers<[1], [1], [0], [0], [0, 0, 1, 0], [], []>} : vector<64x32xbf16>, vector<512x32xbf16>, vector<64x512xf32> -> vector<64x512xf32>
    %c0_3 = arith.constant 0 : index
    %c0_4 = arith.constant 0 : index
    %4 = vector.load %arg3[%c0_3, %c0_4] : memref<64x1xf32, #tpu.memory_space<vmem>>, vector<64x1xf32>
    %5 = vector.broadcast %4 : vector<64x1xf32> to vector<64x512xf32>
    %6 = arith.addf %3, %5 : vector<64x512xf32>
    %cst_5 = arith.constant 0.000000e+00 : f32
    %7 = vector.broadcast %cst_5 : f32 to vector<64x512xf32>
    %8 = arith.maximumf %6, %7 : vector<64x512xf32>
    %c0_6 = arith.constant 0 : index
    %c0_7 = arith.constant 0 : index
    %9 = vector.load %arg4[%c0_6, %c0_7] : memref<32x64xbf16, #tpu.memory_space<vmem>>, vector<32x64xbf16>
    %10 = arith.truncf %8 : vector<64x512xf32> to vector<64x512xbf16>
    %cst_8 = arith.constant dense<0.000000e+00> : vector<32x512xf32>
    %11 = tpu.matmul %9, %10, %cst_8 {dimension_numbers = #tpu.dot_dimension_numbers<[1], [0], [0], [1], [0, 0, 1, 1], [], []>} : vector<32x64xbf16>, vector<64x512xbf16>, vector<32x512xf32> -> vector<32x512xf32>
    %c0_9 = arith.constant 0 : index
    %c0_10 = arith.constant 0 : index
    %12 = vector.load %arg5[%c0_9, %c0_10] : memref<32x1xf32, #tpu.memory_space<vmem>>, vector<32x1xf32>
    %13 = vector.broadcast %12 : vector<32x1xf32> to vector<32x512xf32>
    %14 = arith.addf %11, %13 : vector<32x512xf32>
    %cst_11 = arith.constant 0.000000e+00 : f32
    %15 = vector.broadcast %cst_11 : f32 to vector<32x512xf32>
    %16 = arith.maximumf %14, %15 : vector<32x512xf32>
    %c0_12 = arith.constant 0 : index
    %c0_13 = arith.constant 0 : index
    %17 = vector.load %arg6[%c0_12, %c0_13] : memref<32x1xf32, #tpu.memory_space<vmem>>, vector<32x1xf32>
    %18 = vector.broadcast %17 : vector<32x1xf32> to vector<32x512xf32>
    %19 = arith.mulf %18, %16 : vector<32x512xf32>
    %cst_14 = arith.constant dense<0.000000e+00> : vector<512xf32>
    %20 = vector.multi_reduction <add>, %19, %cst_14 [0] : vector<32x512xf32> to vector<512xf32>
    %21 = vector.shape_cast %20 : vector<512xf32> to vector<1x512xf32>
    %c0_15 = arith.constant 0 : index
    %c0_16 = arith.constant 0 : index
    %22 = vector.load %arg7[%c0_15, %c0_16] : memref<1x1xf32, #tpu.memory_space<vmem>>, vector<1x1xf32>
    %23 = vector.broadcast %22 : vector<1x1xf32> to vector<1x512xf32>
    %24 = arith.addf %21, %23 : vector<1x512xf32>
    %25 = arith.negf %24 : vector<1x512xf32>
    %26 = math.exp %25 : vector<1x512xf32>
    %cst_17 = arith.constant 1.000000e+00 : f32
    %27 = vector.broadcast %cst_17 : f32 to vector<1x512xf32>
    %28 = arith.addf %27, %26 : vector<1x512xf32>
    %29 = arith.divf %27, %28 : vector<1x512xf32>
    %c0_18 = arith.constant 0 : index
    %c0_19 = arith.constant 0 : index
    %30 = vector.load %arg8[%c0_18, %c0_19] : memref<1x512xf32, #tpu.memory_space<vmem>>, vector<1x512xf32>
    tpu.vector_store %arg8[%c0_18, %c0_19], %29 {strides = array<i32>} : memref<1x512xf32, #tpu.memory_space<vmem>>, vector<1x512xf32>,
    return
  }
  func.func @transform_0(%arg0: i32) -> (i32, i32) {
    %c0_i32 = arith.constant 0 : i32
    %c0_i32_0 = arith.constant 0 : i32
    return %arg0, %c0_i32 : i32, i32
  }
  func.func @transform_1(%arg0: i32) -> (i32, i32) {
    %c0_i32 = arith.constant 0 : i32
    %c0_i32_0 = arith.constant 0 : i32
    %c0_i32_1 = arith.constant 0 : i32
    return %c0_i32, %c0_i32_0 : i32, i32
  }
  func.func @transform_2(%arg0: i32) -> (i32, i32) {
    %c0_i32 = arith.constant 0 : i32
    %c0_i32_0 = arith.constant 0 : i32
    %c0_i32_1 = arith.constant 0 : i32
    return %c0_i32, %c0_i32_0 : i32, i32
  }
  func.func @transform_3(%arg0: i32) -> (i32, i32) {
    %c0_i32 = arith.constant 0 : i32
    %c0_i32_0 = arith.constant 0 : i32
    %c0_i32_1 = arith.constant 0 : i32
    return %c0_i32, %c0_i32_0 : i32, i32
  }
  func.func @transform_4(%arg0: i32) -> (i32, i32) {
    %c0_i32 = arith.constant 0 : i32
    %c0_i32_0 = arith.constant 0 : i32
    %c0_i32_1 = arith.constant 0 : i32
    return %c0_i32, %c0_i32_0 : i32, i32
  }
  func.func @transform_5(%arg0: i32) -> (i32, i32) {
    %c0_i32 = arith.constant 0 : i32
    %c0_i32_0 = arith.constant 0 : i32
    %c0_i32_1 = arith.constant 0 : i32
    return %c0_i32, %c0_i32_0 : i32, i32
  }
  func.func @transform_6(%arg0: i32) -> (i32, i32) {
    %c0_i32 = arith.constant 0 : i32
    %c0_i32_0 = arith.constant 0 : i32
    %c0_i32_1 = arith.constant 0 : i32
    return %c0_i32, %c0_i32_0 : i32, i32
  }
  func.func @transform_7(%arg0: i32) -> (i32, i32) {
    %c0_i32 = arith.constant 0 : i32
    %c0_i32_0 = arith.constant 0 : i32
    return %c0_i32, %arg0 : i32, i32
  }
}

module attributes {stable_mosaic.version = 11 : i64} {
  func.func @mlp_kernel(%arg0: i32, %arg1: memref<512x32xf32, #tpu.memory_space<vmem>>, %arg2: memref<64x32xbf16, #tpu.memory_space<vmem>>, %arg3: memref<64x1xf32, #tpu.memory_space<vmem>>, %arg4: memref<32x64xbf16, #tpu.memory_space<vmem>>, %arg5: memref<32x1xf32, #tpu.memory_space<vmem>>, %arg6: memref<32x1xf32, #tpu.memory_space<vmem>>, %arg7: memref<1x1xf32, #tpu.memory_space<vmem>>, %arg8: memref<1x512xf32, #tpu.memory_space<vmem>>) attributes {dimension_semantics = [#tpu.dimension_semantics<parallel>], iteration_bounds = array<i64: 1>, scalar_prefetch = 0 : i64, scratch_operands = 0 : i64, tpu.core_type = #tpu.core_type<tc>, window_params = [{transform_indices = @transform_0, window_bounds = array<i64: 512, 32>}, {pipeline_mode = #tpu.pipeline_mode<synchronous>, transform_indices = @transform_1, window_bounds = array<i64: 64, 32>}, {pipeline_mode = #tpu.pipeline_mode<synchronous>, transform_indices = @transform_2, window_bounds = array<i64: 64, 1>}, {pipeline_mode = #tpu.pipeline_mode<synchronous>, transform_indices = @transform_3, window_bounds = array<i64: 32, 64>}, {pipeline_mode = #tpu.pipeline_mode<synchronous>, transform_indices = @transform_4, window_bounds = array<i64: 32, 1>}, {pipeline_mode = #tpu.pipeline_mode<synchronous>, transform_indices = @transform_5, window_bounds = array<i64: 32, 1>}, {pipeline_mode = #tpu.pipeline_mode<synchronous>, transform_indices = @transform_6, window_bounds = array<i64: 1, 1>}, {transform_indices = @transform_7, window_bounds = array<i64: 1, 512>}]} {
    %c0 = arith.constant 0 : index
    %c0_0 = arith.constant 0 : index
    %0 = vector.load %arg1[%c0, %c0_0] : memref<512x32xf32, #tpu.memory_space<vmem>>, vector<512x32xf32>
    %1 = arith.truncf %0 : vector<512x32xf32> to vector<512x32xbf16>
    %c0_1 = arith.constant 0 : index
    %c0_2 = arith.constant 0 : index
    %2 = vector.load %arg2[%c0_1, %c0_2] : memref<64x32xbf16, #tpu.memory_space<vmem>>, vector<64x32xbf16>
    %cst = arith.constant dense<0.000000e+00> : vector<64x512xf32>
    %3 = tpu.matmul %2, %1, %cst {dimension_numbers = #tpu.dot_dimension_numbers<[1], [1], [0], [0], [0, 0, 1, 0], [], []>} : vector<64x32xbf16>, vector<512x32xbf16>, vector<64x512xf32> -> vector<64x512xf32>
    %c0_3 = arith.constant 0 : index
    %c0_4 = arith.constant 0 : index
    %4 = vector.load %arg3[%c0_3, %c0_4] : memref<64x1xf32, #tpu.memory_space<vmem>>, vector<64x1xf32>
    %5 = vector.broadcast %4 : vector<64x1xf32> to vector<64x512xf32>
    %6 = arith.addf %3, %5 : vector<64x512xf32>
    %cst_5 = arith.constant 0.000000e+00 : f32
    %7 = vector.broadcast %cst_5 : f32 to vector<64x512xf32>
    %8 = arith.maximumf %6, %7 : vector<64x512xf32>
    %c0_6 = arith.constant 0 : index
    %c0_7 = arith.constant 0 : index
    %9 = vector.load %arg4[%c0_6, %c0_7] : memref<32x64xbf16, #tpu.memory_space<vmem>>, vector<32x64xbf16>
    %10 = arith.truncf %8 : vector<64x512xf32> to vector<64x512xbf16>
    %cst_8 = arith.constant dense<0.000000e+00> : vector<32x512xf32>
    %11 = tpu.matmul %9, %10, %cst_8 {dimension_numbers = #tpu.dot_dimension_numbers<[1], [0], [0], [1], [0, 0, 1, 1], [], []>} : vector<32x64xbf16>, vector<64x512xbf16>, vector<32x512xf32> -> vector<32x512xf32>
    %c0_9 = arith.constant 0 : index
    %c0_10 = arith.constant 0 : index
    %12 = vector.load %arg5[%c0_9, %c0_10] : memref<32x1xf32, #tpu.memory_space<vmem>>, vector<32x1xf32>
    %13 = vector.broadcast %12 : vector<32x1xf32> to vector<32x512xf32>
    %14 = arith.addf %11, %13 : vector<32x512xf32>
    %cst_11 = arith.constant 0.000000e+00 : f32
    %15 = vector.broadcast %cst_11 : f32 to vector<32x512xf32>
    %16 = arith.maximumf %14, %15 : vector<32x512xf32>
    %c0_12 = arith.constant 0 : index
    %c0_13 = arith.constant 0 : index
    %17 = vector.load %arg6[%c0_12, %c0_13] : memref<32x1xf32, #tpu.memory_space<vmem>>, vector<32x1xf32>
    %18 = vector.broadcast %17 : vector<32x1xf32> to vector<32x512xf32>
    %19 = arith.mulf %18, %16 : vector<32x512xf32>
    %cst_14 = arith.constant dense<0.000000e+00> : vector<512xf32>
    %20 = vector.multi_reduction <add>, %19, %cst_14 [0] : vector<32x512xf32> to vector<512xf32>
    %21 = vector.shape_cast %20 : vector<512xf32> to vector<1x512xf32>
    %c0_15 = arith.constant 0 : index
    %c0_16 = arith.constant 0 : index
    %22 = vector.load %arg7[%c0_15, %c0_16] : memref<1x1xf32, #tpu.memory_space<vmem>>, vector<1x1xf32>
    %23 = vector.broadcast %22 : vector<1x1xf32> to vector<1x512xf32>
    %24 = arith.addf %21, %23 : vector<1x512xf32>
    %25 = arith.negf %24 : vector<1x512xf32>
    %26 = math.exp %25 : vector<1x512xf32>
    %cst_17 = arith.constant 1.000000e+00 : f32
    %27 = vector.broadcast %cst_17 : f32 to vector<1x512xf32>
    %28 = arith.addf %27, %26 : vector<1x512xf32>
    %29 = arith.divf %27, %28 : vector<1x512xf32>
    %c0_18 = arith.constant 0 : index
    %c0_19 = arith.constant 0 : index
    %30 = vector.load %arg8[%c0_18, %c0_19] : memref<1x512xf32, #tpu.memory_space<vmem>>, vector<1x512xf32>
    tpu.vector_store %arg8[%c0_18, %c0_19], %29 {strides = array<i32>} : memref<1x512xf32, #tpu.memory_space<vmem>>, vector<1x512xf32>,
    return
  }
  func.func @transform_0(%arg0: i32) -> (i32, i32) {
    %c0_i32 = arith.constant 0 : i32
    %c0_i32_0 = arith.constant 0 : i32
    return %arg0, %c0_i32 : i32, i32
  }
  func.func @transform_1(%arg0: i32) -> (i32, i32) {
    %c0_i32 = arith.constant 0 : i32
    %c0_i32_0 = arith.constant 0 : i32
    %c0_i32_1 = arith.constant 0 : i32
    return %c0_i32, %c0_i32_0 : i32, i32
  }
  func.func @transform_2(%arg0: i32) -> (i32, i32) {
    %c0_i32 = arith.constant 0 : i32
    %c0_i32_0 = arith.constant 0 : i32
    %c0_i32_1 = arith.constant 0 : i32
    return %c0_i32, %c0_i32_0 : i32, i32
  }
  func.func @transform_3(%arg0: i32) -> (i32, i32) {
    %c0_i32 = arith.constant 0 : i32
    %c0_i32_0 = arith.constant 0 : i32
    %c0_i32_1 = arith.constant 0 : i32
    return %c0_i32, %c0_i32_0 : i32, i32
  }
  func.func @transform_4(%arg0: i32) -> (i32, i32) {
    %c0_i32 = arith.constant 0 : i32
    %c0_i32_0 = arith.constant 0 : i32
    %c0_i32_1 = arith.constant 0 : i32
    return %c0_i32, %c0_i32_0 : i32, i32
  }
  func.func @transform_5(%arg0: i32) -> (i32, i32) {
    %c0_i32 = arith.constant 0 : i32
    %c0_i32_0 = arith.constant 0 : i32
    %c0_i32_1 = arith.constant 0 : i32
    return %c0_i32, %c0_i32_0 : i32, i32
  }
  func.func @transform_6(%arg0: i32) -> (i32, i32) {
    %c0_i32 = arith.constant 0 : i32
    %c0_i32_0 = arith.constant 0 : i32
    %c0_i32_1 = arith.constant 0 : i32
    return %c0_i32, %c0_i32_0 : i32, i32
  }
  func.func @transform_7(%arg0: i32) -> (i32, i32) {
    %c0_i32 = arith.constant 0 : i32
    %c0_i32_0 = arith.constant 0 : i32
    return %c0_i32, %arg0 : i32, i32
  }
}

</mosaic_0001>

<llo_original>
// kernel: tpu_custom_call.1
$region0: #{tpu_custom_call.1}
  #allocation0 [shape = 'u32[]', space=smem, size = 0x4, offset = 0x4, fixed_abs, tag = 'smem constant byte address 0x4 - core index']
  #allocation1 [shape = 'u32[144,128]{1,0:T(1,128)}', space=vmem, size = 0x12000, scoped, tag = 'internal scratch']
  #allocation2 [shape = 'f32[1,1]{1,0:T(1,128)S(1)}', space=vmem, size = 0x200, scoped, tag = 'scoped memory for tpu_custom_call.1']
  %s0 = inlined_call_operand.hbm [shape: f32[512,32], index: 0, kind: input, shape index: {}]
  %s1 = inlined_call_operand.hbm [shape: bf16[64,32], index: 1, kind: input, shape index: {}]
  %s2 = inlined_call_operand.hbm [shape: f32[64,1], index: 2, kind: input, shape index: {}]
  %s3 = inlined_call_operand.hbm [shape: bf16[32,64], index: 3, kind: input, shape index: {}]
  %s4 = inlined_call_operand.hbm [shape: f32[32,1], index: 4, kind: input, shape index: {}]
  %s5 = inlined_call_operand.hbm [shape: f32[32,1], index: 5, kind: input, shape index: {}]
  %s6 = inlined_call_operand.<no memory space> [shape: f32[1,1], index: 6, kind: input, shape index: {}]
  %s7 = inlined_call_operand.hbm [shape: f32[1,512], index: 7, kind: output, shape index: {}]
  %s8 = sld [smem:[#allocation0]]
  $region62: #{tpu_custom_call.1} parent=0
    _
  %s10 = ssub.s32 1, %s8
  %s11 = scalar_select 0, %s10, %s8
  %v12 = vstv %s6
  %13 = vst [vmem:[#allocation2] sm:$0x1] %v12
  $region1: #{tpu_custom_call.1} parent=0
    #allocation3 [shape = 'u8[262144]{0}', space=vmem, size = 0x40000, scoped, tag = 'input window, operand 0, single buffered']
    #allocation4 [shape = 's32[1]{0}', space=sflag, size = 0x4, scoped, tag = 'scoped memory for tpu_custom_call.1']
    #allocation5 [shape = 's32[1]{0}', space=sflag, size = 0x4, scoped, tag = 'scoped memory for tpu_custom_call.1']
    #allocation6 [shape = 'u8[16384]{0}', space=vmem, size = 0x4000, scoped, tag = 'input window, operand 1, single buffered']
    #allocation7 [shape = 's32[1]{0}', space=sflag, size = 0x4, scoped, tag = 'scoped memory for tpu_custom_call.1']
    #allocation8 [shape = 'u8[32768]{0}', space=vmem, size = 0x8000, scoped, tag = 'input window, operand 2, single buffered']
    #allocation9 [shape = 'u8[8192]{0}', space=vmem, size = 0x2000, scoped, tag = 'input window, operand 3, single buffered']
    #allocation10 [shape = 's32[1]{0}', space=sflag, size = 0x4, scoped, tag = 'scoped memory for tpu_custom_call.1']
    #allocation11 [shape = 'u8[16384]{0}', space=vmem, size = 0x4000, scoped, tag = 'input window, operand 4, single buffered']
    #allocation12 [shape = 'u8[16384]{0}', space=vmem, size = 0x4000, scoped, tag = 'input window, operand 5, single buffered']
    #allocation13 [shape = 's32[1]{0}', space=sflag, size = 0x4, scoped, tag = 'scoped memory for tpu_custom_call.1']
    #allocation14 [shape = 'u8[2048]{0}', space=vmem, size = 0x800, scoped, tag = 'output window, operand 0, single buffered']
    %14 = vsyncpa [#allocation4], 0
    %15 = vsyncpa [#allocation7], 0
    %16 = vsyncpa [#allocation10], 0
    %17 = vsyncpa [#allocation13], 0
    %18 = vsyncpa [#allocation5], 0
    // Predicated region
    $region2: #{tpu_custom_call.1} parent=1 // pred_check
      _
    $region3: #{tpu_custom_call.1} parent=1 // pred_check_branch
      %20 = sbr.rel (0) target = $region5
    $region4: #{tpu_custom_call.1} parent=1 // pred_region
      %s22 = ssub.s32 8192, 8192
      %23 = vsyncadd [#allocation4], %s22
      %s24 = sshll.u32 [#allocation3], 4
      %s25 = int_to_ptr.vmem [resolvable:$true] %s24
      %30 = dma.hbm_to_vmem [thread:$0]  %s0, 8192, %s25, [#allocation4], 128, 128, 8
    $region5: #{tpu_custom_call.1} parent=1 // pred_fallthru
      _
    // Predicated region
    $region6: #{tpu_custom_call.1} parent=1 // pred_check
      _
    $region7: #{tpu_custom_call.1} parent=1 // pred_check_branch
      %32 = sbr.rel (0) target = $region9
    $region8: #{tpu_custom_call.1} parent=1 // pred_region
      %s34 = ssub.s32 512, 512
      %35 = vsyncadd [#allocation7], %s34
      %s36 = sshll.u32 [#allocation6], 4
      %s37 = int_to_ptr.vmem [resolvable:$true] %s36
      %42 = dma.hbm_to_vmem [thread:$0]  %s1, 512, %s37, [#allocation7], 64, 64, 4
    $region9: #{tpu_custom_call.1} parent=1 // pred_fallthru
      _
    // Predicated region
    $region10: #{tpu_custom_call.1} parent=1 // pred_check
      _
    $region11: #{tpu_custom_call.1} parent=1 // pred_check_branch
      %44 = sbr.rel (0) target = $region13
    $region12: #{tpu_custom_call.1} parent=1 // pred_region
      %s46 = ssub.s32 1024, 1024
      %47 = vsyncadd [#allocation7], %s46
      %s48 = sshll.u32 [#allocation8], 4
      %s49 = int_to_ptr.vmem [resolvable:$true] %s48
      %54 = dma.hbm_to_vmem [thread:$0]  %s2, 1024, %s49, [#allocation7], 128, 128, 8
    $region13: #{tpu_custom_call.1} parent=1 // pred_fallthru
      _
    // Predicated region
    $region14: #{tpu_custom_call.1} parent=1 // pred_check
      _
    $region15: #{tpu_custom_call.1} parent=1 // pred_check_branch
      %56 = sbr.rel (0) target = $region17
    $region16: #{tpu_custom_call.1} parent=1 // pred_region
      %s58 = ssub.s32 256, 256
      %59 = vsyncadd [#allocation10], %s58
      %s60 = sshll.u32 [#allocation9], 4
      %s61 = int_to_ptr.vmem [resolvable:$true] %s60
      %66 = dma.hbm_to_vmem [thread:$0]  %s3, 256, %s61, [#allocation10], 64, 64, 4
    $region17: #{tpu_custom_call.1} parent=1 // pred_fallthru
      _
    // Predicated region
    $region18: #{tpu_custom_call.1} parent=1 // pred_check
      _
    $region19: #{tpu_custom_call.1} parent=1 // pred_check_branch
      %68 = sbr.rel (0) target = $region21
    $region20: #{tpu_custom_call.1} parent=1 // pred_region
      %s70 = ssub.s32 512, 512
      %71 = vsyncadd [#allocation10], %s70
      %s72 = sshll.u32 [#allocation11], 4
      %s73 = int_to_ptr.vmem [resolvable:$true] %s72
      %78 = dma.hbm_to_vmem [thread:$0]  %s4, 512, %s73, [#allocation10], 128, 128, 8
    $region21: #{tpu_custom_call.1} parent=1 // pred_fallthru
      _
    // Predicated region
    $region22: #{tpu_custom_call.1} parent=1 // pred_check
      _
    $region23: #{tpu_custom_call.1} parent=1 // pred_check_branch
      %80 = sbr.rel (0) target = $region25
    $region24: #{tpu_custom_call.1} parent=1 // pred_region
      %s82 = ssub.s32 512, 512
      %83 = vsyncadd [#allocation13], %s82
      %s84 = sshll.u32 [#allocation12], 4
      %s85 = int_to_ptr.vmem [resolvable:$true] %s84
      %90 = dma.hbm_to_vmem [thread:$0]  %s5, 512, %s85, [#allocation13], 128, 128, 8
    $region25: #{tpu_custom_call.1} parent=1 // pred_fallthru
      _
    // Predicated region
    $region26: #{tpu_custom_call.1} parent=1 // pred_check
      _
    $region27: #{tpu_custom_call.1} parent=1 // pred_check_branch
      %92 = sbr.rel (0) target = $region29
    $region28: #{tpu_custom_call.1} parent=1 // pred_region
      _
    $region29: #{tpu_custom_call.1} parent=1 // pred_fallthru
      _
    // Predicated region
    $region30: #{tpu_custom_call.1} parent=1 // pred_check
      _
    $region31: #{tpu_custom_call.1} parent=1 // pred_check_branch
      %94 = sbr.rel (0) target = $region33
    $region32: #{tpu_custom_call.1} parent=1 // pred_region
      %95 = dma.done [#allocation4], 8192
    $region33: #{tpu_custom_call.1} parent=1 // pred_fallthru
      _
    // Predicated region
    $region34: #{tpu_custom_call.1} parent=1 // pred_check
      _
    $region35: #{tpu_custom_call.1} parent=1 // pred_check_branch
      %97 = sbr.rel (0) target = $region37
    $region36: #{tpu_custom_call.1} parent=1 // pred_region
      %98 = dma.done [#allocation7], 512
    $region37: #{tpu_custom_call.1} parent=1 // pred_fallthru
      _
    // Predicated region
    $region38: #{tpu_custom_call.1} parent=1 // pred_check
      _
    $region39: #{tpu_custom_call.1} parent=1 // pred_check_branch
      %100 = sbr.rel (0) target = $region41
    $region40: #{tpu_custom_call.1} parent=1 // pred_region
      %101 = dma.done [#allocation7], 1024
    $region41: #{tpu_custom_call.1} parent=1 // pred_fallthru
      _
    // Predicated region
    $region42: #{tpu_custom_call.1} parent=1 // pred_check
      _
    $region43: #{tpu_custom_call.1} parent=1 // pred_check_branch
      %103 = sbr.rel (0) target = $region45
    $region44: #{tpu_custom_call.1} parent=1 // pred_region
      %104 = dma.done [#allocation10], 256
    $region45: #{tpu_custom_call.1} parent=1 // pred_fallthru
      _
    // Predicated region
    $region46: #{tpu_custom_call.1} parent=1 // pred_check
      _
    $region47: #{tpu_custom_call.1} parent=1 // pred_check_branch
      %106 = sbr.rel (0) target = $region49
    $region48: #{tpu_custom_call.1} parent=1 // pred_region
      %107 = dma.done [#allocation10], 512
    $region49: #{tpu_custom_call.1} parent=1 // pred_fallthru
      _
    // Predicated region
    $region50: #{tpu_custom_call.1} parent=1 // pred_check
      _
    $region51: #{tpu_custom_call.1} parent=1 // pred_check_branch
      %109 = sbr.rel (0) target = $region53
    $region52: #{tpu_custom_call.1} parent=1 // pred_region
      %110 = dma.done [#allocation13], 512
    $region53: #{tpu_custom_call.1} parent=1 // pred_fallthru
      _
    %v112 = vld [vmem:[#allocation3] sm:$0xff]
    %v113 = vld [vmem:[#allocation3 + $0x8] sm:$0xff]
    %v114 = vld [vmem:[#allocation3 + $0x10] sm:$0xff]
    %v115 = vld [vmem:[#allocation3 + $0x18] sm:$0xff]
    %v116 = vld [vmem:[#allocation3 + $0x20] sm:$0xff]
    %v117 = vld [vmem:[#allocation3 + $0x28] sm:$0xff]
    %v118 = vld [vmem:[#allocation3 + $0x30] sm:$0xff]
    %v119 = vld [vmem:[#allocation3 + $0x38] sm:$0xff]
    %v120 = vld [vmem:[#allocation3 + $0x40] sm:$0xff]
    %v121 = vld [vmem:[#allocation3 + $0x48] sm:$0xff]
    %v122 = vld [vmem:[#allocation3 + $0x50] sm:$0xff]
    %v123 = vld [vmem:[#allocation3 + $0x58] sm:$0xff]
    %v124 = vld [vmem:[#allocation3 + $0x60] sm:$0xff]
    %v125 = vld [vmem:[#allocation3 + $0x68] sm:$0xff]
    %v126 = vld [vmem:[#allocation3 + $0x70] sm:$0xff]
    %v127 = vld [vmem:[#allocation3 + $0x78] sm:$0xff]
    %v128 = vld [vmem:[#allocation3 + $0x80] sm:$0xff]
    %v129 = vld [vmem:[#allocation3 + $0x88] sm:$0xff]
    %v130 = vld [vmem:[#allocation3 + $0x90] sm:$0xff]
    %v131 = vld [vmem:[#allocation3 + $0x98] sm:$0xff]
    %v132 = vld [vmem:[#allocation3 + $0xa0] sm:$0xff]
    %v133 = vld [vmem:[#allocation3 + $0xa8] sm:$0xff]
    %v134 = vld [vmem:[#allocation3 + $0xb0] sm:$0xff]
    %v135 = vld [vmem:[#allocation3 + $0xb8] sm:$0xff]
    %v136 = vld [vmem:[#allocation3 + $0xc0] sm:$0xff]
    %v137 = vld [vmem:[#allocation3 + $0xc8] sm:$0xff]
    %v138 = vld [vmem:[#allocation3 + $0xd0] sm:$0xff]
    %v139 = vld [vmem:[#allocation3 + $0xd8] sm:$0xff]
    %v140 = vld [vmem:[#allocation3 + $0xe0] sm:$0xff]
    %v141 = vld [vmem:[#allocation3 + $0xe8] sm:$0xff]
    %v142 = vld [vmem:[#allocation3 + $0xf0] sm:$0xff]
    %v143 = vld [vmem:[#allocation3 + $0xf8] sm:$0xff]
    %v144 = vld [vmem:[#allocation3 + $0x100] sm:$0xff]
    %v145 = vld [vmem:[#allocation3 + $0x108] sm:$0xff]
    %v146 = vld [vmem:[#allocation3 + $0x110] sm:$0xff]
    %v147 = vld [vmem:[#allocation3 + $0x118] sm:$0xff]
    %v148 = vld [vmem:[#allocation3 + $0x120] sm:$0xff]
    %v149 = vld [vmem:[#allocation3 + $0x128] sm:$0xff]
    %v150 = vld [vmem:[#allocation3 + $0x130] sm:$0xff]
    %v151 = vld [vmem:[#allocation3 + $0x138] sm:$0xff]
    %v152 = vld [vmem:[#allocation3 + $0x140] sm:$0xff]
    %v153 = vld [vmem:[#allocation3 + $0x148] sm:$0xff]
    %v154 = vld [vmem:[#allocation3 + $0x150] sm:$0xff]
    %v155 = vld [vmem:[#allocation3 + $0x158] sm:$0xff]
    %v156 = vld [vmem:[#allocation3 + $0x160] sm:$0xff]
    %v157 = vld [vmem:[#allocation3 + $0x168] sm:$0xff]
    %v158 = vld [vmem:[#allocation3 + $0x170] sm:$0xff]
    %v159 = vld [vmem:[#allocation3 + $0x178] sm:$0xff]
    %v160 = vld [vmem:[#allocation3 + $0x180] sm:$0xff]
    %v161 = vld [vmem:[#allocation3 + $0x188] sm:$0xff]
    %v162 = vld [vmem:[#allocation3 + $0x190] sm:$0xff]
    %v163 = vld [vmem:[#allocation3 + $0x198] sm:$0xff]
    %v164 = vld [vmem:[#allocation3 + $0x1a0] sm:$0xff]
    %v165 = vld [vmem:[#allocation3 + $0x1a8] sm:$0xff]
    %v166 = vld [vmem:[#allocation3 + $0x1b0] sm:$0xff]
    %v167 = vld [vmem:[#allocation3 + $0x1b8] sm:$0xff]
    %v168 = vld [vmem:[#allocation3 + $0x1c0] sm:$0xff]
    %v169 = vld [vmem:[#allocation3 + $0x1c8] sm:$0xff]
    %v170 = vld [vmem:[#allocation3 + $0x1d0] sm:$0xff]
    %v171 = vld [vmem:[#allocation3 + $0x1d8] sm:$0xff]
    %v172 = vld [vmem:[#allocation3 + $0x1e0] sm:$0xff]
    %v173 = vld [vmem:[#allocation3 + $0x1e8] sm:$0xff]
    %v174 = vld [vmem:[#allocation3 + $0x1f0] sm:$0xff]
    %v175 = vld [vmem:[#allocation3 + $0x1f8] sm:$0xff]
    %v176 = vpack.c.bf16 %v113, %v112
    %v177 = vpack.c.bf16 %v115, %v114
    %v178 = vpack.c.bf16 %v117, %v116
    %v179 = vpack.c.bf16 %v119, %v118
    %v180 = vpack.c.bf16 %v121, %v120
    %v181 = vpack.c.bf16 %v123, %v122
    %v182 = vpack.c.bf16 %v125, %v124
    %v183 = vpack.c.bf16 %v127, %v126
    %v184 = vpack.c.bf16 %v129, %v128
    %v185 = vpack.c.bf16 %v131, %v130
    %v186 = vpack.c.bf16 %v133, %v132
    %v187 = vpack.c.bf16 %v135, %v134
    %v188 = vpack.c.bf16 %v137, %v136
    %v189 = vpack.c.bf16 %v139, %v138
    %v190 = vpack.c.bf16 %v141, %v140
    %v191 = vpack.c.bf16 %v143, %v142
    %v192 = vpack.c.bf16 %v145, %v144
    %v193 = vpack.c.bf16 %v147, %v146
    %v194 = vpack.c.bf16 %v149, %v148
    %v195 = vpack.c.bf16 %v151, %v150
    %v196 = vpack.c.bf16 %v153, %v152
    %v197 = vpack.c.bf16 %v155, %v154
    %v198 = vpack.c.bf16 %v157, %v156
    %v199 = vpack.c.bf16 %v159, %v158
    %v200 = vpack.c.bf16 %v161, %v160
    %v201 = vpack.c.bf16 %v163, %v162
    %v202 = vpack.c.bf16 %v165, %v164
    %v203 = vpack.c.bf16 %v167, %v166
    %v204 = vpack.c.bf16 %v169, %v168
    %v205 = vpack.c.bf16 %v171, %v170
    %v206 = vpack.c.bf16 %v173, %v172
    %v207 = vpack.c.bf16 %v175, %v174
    %v208 = vld [vmem:[#allocation6] sm:$0xf]
    %v209 = vld [vmem:[#allocation6 + $0x4] sm:$0xf]
    %v210 = vld [vmem:[#allocation6 + $0x8] sm:$0xf]
    %v211 = vld [vmem:[#allocation6 + $0xc] sm:$0xf]
    %v212 = vld [vmem:[#allocation6 + $0x10] sm:$0xf]
    %v213 = vld [vmem:[#allocation6 + $0x14] sm:$0xf]
    %v214 = vld [vmem:[#allocation6 + $0x18] sm:$0xf]
    %v215 = vld [vmem:[#allocation6 + $0x1c] sm:$0xf]
    %v216 = vld [vmem:[#allocation8] sm:$0xff]
    %v217 = vld [vmem:[#allocation8 + $0x8] sm:$0xff]
    %v218 = vld [vmem:[#allocation8 + $0x10] sm:$0xff]
    %v219 = vld [vmem:[#allocation8 + $0x18] sm:$0xff]
    %v220 = vld [vmem:[#allocation8 + $0x20] sm:$0xff]
    %v221 = vld [vmem:[#allocation8 + $0x28] sm:$0xff]
    %v222 = vld [vmem:[#allocation8 + $0x30] sm:$0xff]
    %v223 = vld [vmem:[#allocation8 + $0x38] sm:$0xff]
    %225 = vset.pattern.permute.xlu0 0
    %226 = vperm.xlu0 %225, %v216
    %v227 = vpop.permute.xlu0 %226
    %230 = vset.pattern.permute.xlu0 0
    %231 = vperm.xlu0 %230, %v217
    %v232 = vpop.permute.xlu0 %231
    %235 = vset.pattern.permute.xlu0 0
    %236 = vperm.xlu0 %235, %v218
    %v237 = vpop.permute.xlu0 %236
    %240 = vset.pattern.permute.xlu0 0
    %241 = vperm.xlu0 %240, %v219
    %v242 = vpop.permute.xlu0 %241
    %245 = vset.pattern.permute.xlu0 0
    %246 = vperm.xlu0 %245, %v220
    %v247 = vpop.permute.xlu0 %246
    %250 = vset.pattern.permute.xlu0 0
    %251 = vperm.xlu0 %250, %v221
    %v252 = vpop.permute.xlu0 %251
    %255 = vset.pattern.permute.xlu0 0
    %256 = vperm.xlu0 %255, %v222
    %v257 = vpop.permute.xlu0 %256
    %260 = vset.pattern.permute.xlu0 0
    %261 = vperm.xlu0 %260, %v223
    %v262 = vpop.permute.xlu0 %261
    %v272 = vunpack.c.l.b16 %v208
    %v273 = vunpack.c.l.b16 %v209
    %v274 = vunpack.c.l.b16 %v210
    %v275 = vunpack.c.l.b16 %v211
    %v276 = vunpack.c.l.b16 %v212
    %v277 = vunpack.c.l.b16 %v213
    %v278 = vunpack.c.l.b16 %v214
    %v279 = vunpack.c.l.b16 %v215
    %v280 = vpack.c.b16 %v273, %v272
    %v281 = vpack.c.b16 %v275, %v274
    %v282 = vpack.c.b16 %v277, %v276
    %v283 = vpack.c.b16 %v279, %v278
    %vm284 = vcmask 261120
    %v286 = vsel %vm284, %v280, 0
    %v289 = vsel %vm284, %v281, 0
    %v292 = vsel %vm284, %v282, 0
    %v295 = vsel %vm284, %v283, 0
    %v298 = vsel %vm284, %v176, 0
    %v301 = vsel %vm284, %v177, 0
    %v304 = vsel %vm284, %v178, 0
    %v307 = vsel %vm284, %v179, 0
    %v310 = vsel %vm284, %v180, 0
    %v313 = vsel %vm284, %v181, 0
    %v316 = vsel %vm284, %v182, 0
    %v319 = vsel %vm284, %v183, 0
    %v322 = vsel %vm284, %v184, 0
    %v325 = vsel %vm284, %v185, 0
    %v328 = vsel %vm284, %v186, 0
    %v331 = vsel %vm284, %v187, 0
    %v334 = vsel %vm284, %v188, 0
    %v337 = vsel %vm284, %v189, 0
    %v340 = vsel %vm284, %v190, 0
    %v343 = vsel %vm284, %v191, 0
    %v346 = vsel %vm284, %v192, 0
    %v349 = vsel %vm284, %v193, 0
    %v352 = vsel %vm284, %v194, 0
    %v355 = vsel %vm284, %v195, 0
    %v358 = vsel %vm284, %v196, 0
    %v361 = vsel %vm284, %v197, 0
    %v364 = vsel %vm284, %v198, 0
    %v367 = vsel %vm284, %v199, 0
    %v370 = vsel %vm284, %v200, 0
    %v373 = vsel %vm284, %v201, 0
    %v376 = vsel %vm284, %v202, 0
    %v379 = vsel %vm284, %v203, 0
    %v382 = vsel %vm284, %v204, 0
    %v385 = vsel %vm284, %v205, 0
    %v388 = vsel %vm284, %v206, 0
    %v391 = vsel %vm284, %v207, 0
    %393 = vmatprep.subr.bf16.mxu0 0
    %394 = vmatpush1.bf16.xpose.msra.mxu0 %v298
    %395 = vmatprep.subr.bf16.mxu0 0
    %396 = vmatpush1.bf16.xpose.msra.mxu0 %v301
    %397 = vmatprep.subr.bf16.mxu0 0
    %398 = vmatpush1.bf16.xpose.msra.mxu0 %v304
    %399 = vmatprep.subr.bf16.mxu0 0
    %400 = vmatpush1.bf16.xpose.msra.mxu0 %v307
    %401 = vmatprep.subr.bf16.mxu0 0
    %402 = vmatpush1.bf16.xpose.msra.mxu0 %v310
    %403 = vmatprep.subr.bf16.mxu0 0
    %404 = vmatpush1.bf16.xpose.msra.mxu0 %v313
    %405 = vmatprep.subr.bf16.mxu0 0
    %406 = vmatpush1.bf16.xpose.msra.mxu0 %v316
    %407 = vmatprep.subr.bf16.mxu0 0
    %408 = vmatpush1.bf16.xpose.msra.mxu0 %v319
    %409 = vmatprep.subr.bf16.mxu0 0
    %410 = vmatpush1.bf16.xpose.msra.mxu0 %v322
    %411 = vmatprep.subr.bf16.mxu0 0
    %412 = vmatpush1.bf16.xpose.msra.mxu0 %v325
    %413 = vmatprep.subr.bf16.mxu0 0
    %414 = vmatpush1.bf16.xpose.msra.mxu0 %v328
    %415 = vmatprep.subr.bf16.mxu0 0
    %416 = vmatpush1.bf16.xpose.msra.mxu0 %v331
    %417 = vmatprep.subr.bf16.mxu0 0
    %418 = vmatpush1.bf16.xpose.msra.mxu0 %v334
    %419 = vmatprep.subr.bf16.mxu0 0
    %420 = vmatpush1.bf16.xpose.msra.mxu0 %v337
    %421 = vmatprep.subr.bf16.mxu0 0
    %422 = vmatpush1.bf16.xpose.msra.mxu0 %v340
    %423 = vmatprep.subr.bf16.mxu0 0
    %424 = vmatpush1.bf16.xpose.msra.mxu0 %v343
    %425 = vmatprep.mubr.bf16.mxu0 0
    %426 = vmatmul.mubr.bf16.gmra.mrb[0].mxu0 %v286
    %v427 = vpop.f32.mrb[0].mxu0
    %v428 = vadd.f32 %v227, %v427
    %v429 = vpop.f32.mrb[0].mxu0
    %v430 = vadd.f32 %v227, %v429
    %v431 = vpop.f32.mrb[0].mxu0
    %v432 = vadd.f32 %v232, %v431
    %v433 = vpop.f32.mrb[0].mxu0
    %v434 = vadd.f32 %v232, %v433
    %435 = vmatprep.mubr.bf16.mxu0 0
    %436 = vmatmul.mubr.bf16.gmra.mrb[0].mxu0 %v289
    %v437 = vpop.f32.mrb[0].mxu0
    %v438 = vadd.f32 %v237, %v437
    %v439 = vpop.f32.mrb[0].mxu0
    %v440 = vadd.f32 %v237, %v439
    %v441 = vpop.f32.mrb[0].mxu0
    %v442 = vadd.f32 %v242, %v441
    %v443 = vpop.f32.mrb[0].mxu0
    %v444 = vadd.f32 %v242, %v443
    %445 = vmatprep.mubr.bf16.mxu0 0
    %446 = vmatmul.mubr.bf16.gmra.mrb[0].mxu0 %v292
    %v447 = vpop.f32.mrb[0].mxu0
    %v448 = vadd.f32 %v247, %v447
    %v449 = vpop.f32.mrb[0].mxu0
    %v450 = vadd.f32 %v247, %v449
    %v451 = vpop.f32.mrb[0].mxu0
    %v452 = vadd.f32 %v252, %v451
    %v453 = vpop.f32.mrb[0].mxu0
    %v454 = vadd.f32 %v252, %v453
    %455 = vmatprep.mubr.bf16.mxu0 0
    %456 = vmatmul.mubr.bf16.gmra.mrb[0].mxu0 %v295
    %v457 = vpop.f32.mrb[0].mxu0
    %v458 = vadd.f32 %v257, %v457
    %v459 = vpop.f32.mrb[0].mxu0
    %v460 = vadd.f32 %v257, %v459
    %v461 = vpop.f32.mrb[0].mxu0
    %v462 = vadd.f32 %v262, %v461
    %v463 = vpop.f32.mrb[0].mxu0
    %v464 = vadd.f32 %v262, %v463
    %465 = vdwg.mxu0
    %466 = vmatprep.subr.bf16.mxu0 0
    %467 = vmatpush1.bf16.xpose.msra.mxu0 %v346
    %468 = vmatprep.subr.bf16.mxu0 0
    %469 = vmatpush1.bf16.xpose.msra.mxu0 %v349
    %470 = vmatprep.subr.bf16.mxu0 0
    %471 = vmatpush1.bf16.xpose.msra.mxu0 %v352
    %472 = vmatprep.subr.bf16.mxu0 0
    %473 = vmatpush1.bf16.xpose.msra.mxu0 %v355
    %474 = vmatprep.subr.bf16.mxu0 0
    %475 = vmatpush1.bf16.xpose.msra.mxu0 %v358
    %476 = vmatprep.subr.bf16.mxu0 0
    %477 = vmatpush1.bf16.xpose.msra.mxu0 %v361
    %478 = vmatprep.subr.bf16.mxu0 0
    %479 = vmatpush1.bf16.xpose.msra.mxu0 %v364
    %480 = vmatprep.subr.bf16.mxu0 0
    %481 = vmatpush1.bf16.xpose.msra.mxu0 %v367
    %482 = vmatprep.subr.bf16.mxu0 0
    %483 = vmatpush1.bf16.xpose.msra.mxu0 %v370
    %484 = vmatprep.subr.bf16.mxu0 0
    %485 = vmatpush1.bf16.xpose.msra.mxu0 %v373
    %486 = vmatprep.subr.bf16.mxu0 0
    %487 = vmatpush1.bf16.xpose.msra.mxu0 %v376
    %488 = vmatprep.subr.bf16.mxu0 0
    %489 = vmatpush1.bf16.xpose.msra.mxu0 %v379
    %490 = vmatprep.subr.bf16.mxu0 0
    %491 = vmatpush1.bf16.xpose.msra.mxu0 %v382
    %492 = vmatprep.subr.bf16.mxu0 0
    %493 = vmatpush1.bf16.xpose.msra.mxu0 %v385
    %494 = vmatprep.subr.bf16.mxu0 0
    %495 = vmatpush1.bf16.xpose.msra.mxu0 %v388
    %496 = vmatprep.subr.bf16.mxu0 0
    %497 = vmatpush1.bf16.xpose.msra.mxu0 %v391
    %498 = vmatprep.mubr.bf16.mxu0 0
    %499 = vmatmul.mubr.bf16.gmra.mrb[0].mxu0 %v286
    %v500 = vpop.f32.mrb[0].mxu0
    %v501 = vadd.f32 %v227, %v500
    %v502 = vpop.f32.mrb[0].mxu0
    %v503 = vadd.f32 %v227, %v502
    %v504 = vpop.f32.mrb[0].mxu0
    %v505 = vadd.f32 %v232, %v504
    %v506 = vpop.f32.mrb[0].mxu0
    %v507 = vadd.f32 %v232, %v506
    %508 = vmatprep.mubr.bf16.mxu0 0
    %509 = vmatmul.mubr.bf16.gmra.mrb[0].mxu0 %v289
    %v510 = vpop.f32.mrb[0].mxu0
    %v511 = vadd.f32 %v237, %v510
    %v512 = vpop.f32.mrb[0].mxu0
    %v513 = vadd.f32 %v237, %v512
    %v514 = vpop.f32.mrb[0].mxu0
    %v515 = vadd.f32 %v242, %v514
    %v516 = vpop.f32.mrb[0].mxu0
    %v517 = vadd.f32 %v242, %v516
    %518 = vmatprep.mubr.bf16.mxu0 0
    %519 = vmatmul.mubr.bf16.gmra.mrb[0].mxu0 %v292
    %v520 = vpop.f32.mrb[0].mxu0
    %v521 = vadd.f32 %v247, %v520
    %v522 = vpop.f32.mrb[0].mxu0
    %v523 = vadd.f32 %v247, %v522
    %v524 = vpop.f32.mrb[0].mxu0
    %v525 = vadd.f32 %v252, %v524
    %v526 = vpop.f32.mrb[0].mxu0
    %v527 = vadd.f32 %v252, %v526
    %528 = vmatprep.mubr.bf16.mxu0 0
    %529 = vmatmul.mubr.bf16.gmra.mrb[0].mxu0 %v295
    %v530 = vpop.f32.mrb[0].mxu0
    %v531 = vadd.f32 %v257, %v530
    %v532 = vpop.f32.mrb[0].mxu0
    %v533 = vadd.f32 %v257, %v532
    %v534 = vpop.f32.mrb[0].mxu0
    %v535 = vadd.f32 %v262, %v534
    %v536 = vpop.f32.mrb[0].mxu0
    %v537 = vadd.f32 %v262, %v536
    %538 = vdwg.mxu0
    %v539 = vmax.f32 %v428, 0.0
    %v540 = vmax.f32 %v430, 0.0
    %v541 = vmax.f32 %v501, 0.0
    %v542 = vmax.f32 %v503, 0.0
    %v543 = vmax.f32 %v432, 0.0
    %v544 = vmax.f32 %v434, 0.0
    %v545 = vmax.f32 %v505, 0.0
    %v546 = vmax.f32 %v507, 0.0
    %v547 = vmax.f32 %v438, 0.0
    %v548 = vmax.f32 %v440, 0.0
    %v549 = vmax.f32 %v511, 0.0
    %v550 = vmax.f32 %v513, 0.0
    %v551 = vmax.f32 %v442, 0.0
    %v552 = vmax.f32 %v444, 0.0
    %v553 = vmax.f32 %v515, 0.0
    %v554 = vmax.f32 %v517, 0.0
    %v555 = vmax.f32 %v448, 0.0
    %v556 = vmax.f32 %v450, 0.0
    %v557 = vmax.f32 %v521, 0.0
    %v558 = vmax.f32 %v523, 0.0
    %v559 = vmax.f32 %v452, 0.0
    %v560 = vmax.f32 %v454, 0.0
    %v561 = vmax.f32 %v525, 0.0
    %v562 = vmax.f32 %v527, 0.0
    %v563 = vmax.f32 %v458, 0.0
    %v564 = vmax.f32 %v460, 0.0
    %v565 = vmax.f32 %v531, 0.0
    %v566 = vmax.f32 %v533, 0.0
    %v567 = vmax.f32 %v462, 0.0
    %v568 = vmax.f32 %v464, 0.0
    %v569 = vmax.f32 %v535, 0.0
    %v570 = vmax.f32 %v537, 0.0
    %v571 = vld [vmem:[#allocation9] sm:$0xf]
    %v572 = vld [vmem:[#allocation9 + $0x4] sm:$0xf]
    %v573 = vld [vmem:[#allocation9 + $0x8] sm:$0xf]
    %v574 = vld [vmem:[#allocation9 + $0xc] sm:$0xf]
    %v575 = vpack.c.bf16 %v543, %v539
    %v576 = vpack.c.bf16 %v544, %v540
    %v577 = vpack.c.bf16 %v545, %v541
    %v578 = vpack.c.bf16 %v546, %v542
    %v579 = vpack.c.bf16 %v551, %v547
    %v580 = vpack.c.bf16 %v552, %v548
    %v581 = vpack.c.bf16 %v553, %v549
    %v582 = vpack.c.bf16 %v554, %v550
    %v583 = vpack.c.bf16 %v559, %v555
    %v584 = vpack.c.bf16 %v560, %v556
    %v585 = vpack.c.bf16 %v561, %v557
    %v586 = vpack.c.bf16 %v562, %v558
    %v587 = vpack.c.bf16 %v567, %v563
    %v588 = vpack.c.bf16 %v568, %v564
    %v589 = vpack.c.bf16 %v569, %v565
    %v590 = vpack.c.bf16 %v570, %v566
    %v591 = vld [vmem:[#allocation11] sm:$0xff]
    %v592 = vld [vmem:[#allocation11 + $0x8] sm:$0xff]
    %v593 = vld [vmem:[#allocation11 + $0x10] sm:$0xff]
    %v594 = vld [vmem:[#allocation11 + $0x18] sm:$0xff]
    %596 = vset.pattern.permute.xlu0 0
    %597 = vperm.xlu0 %596, %v591
    %v598 = vpop.permute.xlu0 %597
    %601 = vset.pattern.permute.xlu0 0
    %602 = vperm.xlu0 %601, %v592
    %v603 = vpop.permute.xlu0 %602
    %606 = vset.pattern.permute.xlu0 0
    %607 = vperm.xlu0 %606, %v593
    %v608 = vpop.permute.xlu0 %607
    %611 = vset.pattern.permute.xlu0 0
    %612 = vperm.xlu0 %611, %v594
    %v613 = vpop.permute.xlu0 %612
    %v619 = vunpack.c.l.b16 %v571
    %v620 = vunpack.c.l.b16 %v572
    %v621 = vunpack.c.l.b16 %v573
    %v622 = vunpack.c.l.b16 %v574
    %v623 = vpack.c.b16 %v620, %v619
    %v624 = vpack.c.b16 %v622, %v621
    %vm625 = vcmask 523264
    %v627 = vsel %vm625, %v623, 0
    %v630 = vsel %vm625, %v624, 0
    %632 = vmatprep.subr.bf16.mxu0 %v576
    %633 = vmatpush1.bf16.msra.mxu0 %v575
    %634 = vmatprep.subr.bf16.mxu0 %v580
    %635 = vmatpush1.bf16.msra.mxu0 %v579
    %636 = vmatprep.subr.bf16.mxu0 %v584
    %637 = vmatpush1.bf16.msra.mxu0 %v583
    %638 = vmatprep.subr.bf16.mxu0 %v588
    %639 = vmatpush1.bf16.msra.mxu0 %v587
    %640 = vmatprep.subr.bf16.mxu0 0
    %641 = vmatpush1.bf16.msra.mxu0 0
    %642 = vmatprep.subr.bf16.mxu0 0
    %643 = vmatpush1.bf16.msra.mxu0 0
    %644 = vmatprep.subr.bf16.mxu0 0
    %645 = vmatpush1.bf16.msra.mxu0 0
    %646 = vmatprep.subr.bf16.mxu0 0
    %647 = vmatpush1.bf16.msra.mxu0 0
    %648 = vmatprep.subr.bf16.mxu0 0
    %649 = vmatpush1.bf16.msra.mxu0 0
    %650 = vmatprep.subr.bf16.mxu0 0
    %651 = vmatpush1.bf16.msra.mxu0 0
    %652 = vmatprep.subr.bf16.mxu0 0
    %653 = vmatpush1.bf16.msra.mxu0 0
    %654 = vmatprep.subr.bf16.mxu0 0
    %655 = vmatpush1.bf16.msra.mxu0 0
    %656 = vmatprep.subr.bf16.mxu0 0
    %657 = vmatpush1.bf16.msra.mxu0 0
    %658 = vmatprep.subr.bf16.mxu0 0
    %659 = vmatpush1.bf16.msra.mxu0 0
    %660 = vmatprep.subr.bf16.mxu0 0
    %661 = vmatpush1.bf16.msra.mxu0 0
    %662 = vmatprep.subr.bf16.mxu0 0
    %663 = vmatpush1.bf16.msra.mxu0 0
    %664 = vmatprep.mubr.bf16.mxu0 0
    %665 = vmatmul.mubr.bf16.gmra.mrb[0].mxu0 %v627
    %v666 = vpop.f32.mrb[0].mxu0
    %v667 = vadd.f32 %v598, %v666
    %v668 = vpop.f32.mrb[0].mxu0
    %v669 = vadd.f32 %v598, %v668
    %v670 = vpop.f32.mrb[0].mxu0
    %v671 = vadd.f32 %v603, %v670
    %v672 = vpop.f32.mrb[0].mxu0
    %v673 = vadd.f32 %v603, %v672
    %674 = vmatprep.mubr.bf16.mxu0 0
    %675 = vmatmul.mubr.bf16.gmra.mrb[0].mxu0 %v630
    %v676 = vpop.f32.mrb[0].mxu0
    %v677 = vadd.f32 %v608, %v676
    %v678 = vpop.f32.mrb[0].mxu0
    %v679 = vadd.f32 %v608, %v678
    %v680 = vpop.f32.mrb[0].mxu0
    %v681 = vadd.f32 %v613, %v680
    %v682 = vpop.f32.mrb[0].mxu0
    %v683 = vadd.f32 %v613, %v682
    %684 = vdwg.mxu0
    %685 = vmatprep.subr.bf16.mxu0 %v578
    %686 = vmatpush1.bf16.msra.mxu0 %v577
    %687 = vmatprep.subr.bf16.mxu0 %v582
    %688 = vmatpush1.bf16.msra.mxu0 %v581
    %689 = vmatprep.subr.bf16.mxu0 %v586
    %690 = vmatpush1.bf16.msra.mxu0 %v585
    %691 = vmatprep.subr.bf16.mxu0 %v590
    %692 = vmatpush1.bf16.msra.mxu0 %v589
    %693 = vmatprep.subr.bf16.mxu0 0
    %694 = vmatpush1.bf16.msra.mxu0 0
    %695 = vmatprep.subr.bf16.mxu0 0
    %696 = vmatpush1.bf16.msra.mxu0 0
    %697 = vmatprep.subr.bf16.mxu0 0
    %698 = vmatpush1.bf16.msra.mxu0 0
    %699 = vmatprep.subr.bf16.mxu0 0
    %700 = vmatpush1.bf16.msra.mxu0 0
    %701 = vmatprep.subr.bf16.mxu0 0
    %702 = vmatpush1.bf16.msra.mxu0 0
    %703 = vmatprep.subr.bf16.mxu0 0
    %704 = vmatpush1.bf16.msra.mxu0 0
    %705 = vmatprep.subr.bf16.mxu0 0
    %706 = vmatpush1.bf16.msra.mxu0 0
    %707 = vmatprep.subr.bf16.mxu0 0
    %708 = vmatpush1.bf16.msra.mxu0 0
    %709 = vmatprep.subr.bf16.mxu0 0
    %710 = vmatpush1.bf16.msra.mxu0 0
    %711 = vmatprep.subr.bf16.mxu0 0
    %712 = vmatpush1.bf16.msra.mxu0 0
    %713 = vmatprep.subr.bf16.mxu0 0
    %714 = vmatpush1.bf16.msra.mxu0 0
    %715 = vmatprep.subr.bf16.mxu0 0
    %716 = vmatpush1.bf16.msra.mxu0 0
    %717 = vmatprep.mubr.bf16.mxu0 0
    %718 = vmatmul.mubr.bf16.gmra.mrb[0].mxu0 %v627
    %v719 = vpop.f32.mrb[0].mxu0
    %v720 = vadd.f32 %v598, %v719
    %v721 = vpop.f32.mrb[0].mxu0
    %v722 = vadd.f32 %v598, %v721
    %v723 = vpop.f32.mrb[0].mxu0
    %v724 = vadd.f32 %v603, %v723
    %v725 = vpop.f32.mrb[0].mxu0
    %v726 = vadd.f32 %v603, %v725
    %727 = vmatprep.mubr.bf16.mxu0 0
    %728 = vmatmul.mubr.bf16.gmra.mrb[0].mxu0 %v630
    %v729 = vpop.f32.mrb[0].mxu0
    %v730 = vadd.f32 %v608, %v729
    %v731 = vpop.f32.mrb[0].mxu0
    %v732 = vadd.f32 %v608, %v731
    %v733 = vpop.f32.mrb[0].mxu0
    %v734 = vadd.f32 %v613, %v733
    %v735 = vpop.f32.mrb[0].mxu0
    %v736 = vadd.f32 %v613, %v735
    %737 = vdwg.mxu0
    %v738 = vmax.f32 %v667, 0.0
    %v739 = vmax.f32 %v669, 0.0
    %v740 = vmax.f32 %v720, 0.0
    %v741 = vmax.f32 %v722, 0.0
    %v742 = vmax.f32 %v671, 0.0
    %v743 = vmax.f32 %v673, 0.0
    %v744 = vmax.f32 %v724, 0.0
    %v745 = vmax.f32 %v726, 0.0
    %v746 = vmax.f32 %v677, 0.0
    %v747 = vmax.f32 %v679, 0.0
    %v748 = vmax.f32 %v730, 0.0
    %v749 = vmax.f32 %v732, 0.0
    %v750 = vmax.f32 %v681, 0.0
    %v751 = vmax.f32 %v683, 0.0
    %v752 = vmax.f32 %v734, 0.0
    %v753 = vmax.f32 %v736, 0.0
    %v754 = vld [vmem:[#allocation12] sm:$0xff]
    %v755 = vld [vmem:[#allocation12 + $0x8] sm:$0xff]
    %v756 = vld [vmem:[#allocation12 + $0x10] sm:$0xff]
    %v757 = vld [vmem:[#allocation12 + $0x18] sm:$0xff]
    %759 = vset.pattern.permute.xlu0 0
    %760 = vperm.xlu0 %759, %v754
    %v761 = vpop.permute.xlu0 %760
    %764 = vset.pattern.permute.xlu0 0
    %765 = vperm.xlu0 %764, %v755
    %v766 = vpop.permute.xlu0 %765
    %769 = vset.pattern.permute.xlu0 0
    %770 = vperm.xlu0 %769, %v756
    %v771 = vpop.permute.xlu0 %770
    %774 = vset.pattern.permute.xlu0 0
    %775 = vperm.xlu0 %774, %v757
    %v776 = vpop.permute.xlu0 %775
    %v778 = vmul.f32 %v761, %v738
    %v779 = vmul.f32 %v761, %v739
    %v780 = vmul.f32 %v761, %v740
    %v781 = vmul.f32 %v761, %v741
    %v782 = vmul.f32 %v766, %v742
    %v783 = vmul.f32 %v766, %v743
    %v784 = vmul.f32 %v766, %v744
    %v785 = vmul.f32 %v766, %v745
    %v786 = vmul.f32 %v771, %v746
    %v787 = vmul.f32 %v771, %v747
    %v788 = vmul.f32 %v771, %v748
    %v789 = vmul.f32 %v771, %v749
    %v790 = vmul.f32 %v776, %v750
    %v791 = vmul.f32 %v776, %v751
    %v792 = vmul.f32 %v776, %v752
    %v793 = vmul.f32 %v776, %v753
    %v794 = vadd.f32 %v778, %v782
    %v795 = vadd.f32 %v794, %v786
    %v796 = vadd.f32 %v795, %v790
    %v797 = vrot.slane %v796, 4
    %v798 = vadd.f32 %v796, %v797
    %v799 = vrot.slane %v798, 2
    %v800 = vadd.f32 %v798, %v799
    %v801 = vrot.slane %v800, 1
    %v802 = vadd.f32 %v800, %v801
    %v803 = vadd.f32 %v779, %v783
    %v804 = vadd.f32 %v803, %v787
    %v805 = vadd.f32 %v804, %v791
    %v806 = vrot.slane %v805, 4
    %v807 = vadd.f32 %v805, %v806
    %v808 = vrot.slane %v807, 2
    %v809 = vadd.f32 %v807, %v808
    %v810 = vrot.slane %v809, 1
    %v811 = vadd.f32 %v809, %v810
    %v812 = vadd.f32 %v780, %v784
    %v813 = vadd.f32 %v812, %v788
    %v814 = vadd.f32 %v813, %v792
    %v815 = vrot.slane %v814, 4
    %v816 = vadd.f32 %v814, %v815
    %v817 = vrot.slane %v816, 2
    %v818 = vadd.f32 %v816, %v817
    %v819 = vrot.slane %v818, 1
    %v820 = vadd.f32 %v818, %v819
    %v821 = vadd.f32 %v781, %v785
    %v822 = vadd.f32 %v821, %v789
    %v823 = vadd.f32 %v822, %v793
    %v824 = vrot.slane %v823, 4
    %v825 = vadd.f32 %v823, %v824
    %v826 = vrot.slane %v825, 2
    %v827 = vadd.f32 %v825, %v826
    %v828 = vrot.slane %v827, 1
    %v829 = vadd.f32 %v827, %v828
    %v830 = vld [vmem:[#allocation2] sm:$0x1]
    %832 = vset.pattern.permute.xlu0 0
    %833 = vperm.xlu0 %832, %v830
    %v834 = vpop.permute.xlu0 %833
    %v836 = vlaneseq
    %v837 = vshrl.u32 %v836, 7
    %v838 = vsub.s32 0, %v837
    %v839 = vrot.slane %v834, %v838
    %v840 = vadd.f32 %v802, %v839
    %v841 = vadd.f32 %v811, %v839
    %v842 = vadd.f32 %v820, %v839
    %v843 = vadd.f32 %v829, %v839
    %v844 = vxor.u32 %v840, 2147483648
    %v845 = vxor.u32 %v841, 2147483648
    %v846 = vxor.u32 %v842, 2147483648
    %v847 = vxor.u32 %v843, 2147483648
    %v848 = vmul.f32 %v844, 1.442695
    %v849 = vpow.pop %v848
    %v850 = vmul.f32 %v845, 1.442695
    %v851 = vpow.pop %v850
    %v852 = vmul.f32 %v846, 1.442695
    %v853 = vpow.pop %v852
    %v854 = vmul.f32 %v847, 1.442695
    %v855 = vpow.pop %v854
    %v856 = vadd.f32 %v849, 1.0
    %v857 = vadd.f32 %v851, 1.0
    %v858 = vadd.f32 %v853, 1.0
    %v859 = vadd.f32 %v855, 1.0
    %v860 = vrcp.pop %v856
    %v861 = vmul.f32 1.0, %v860
    %v862 = vrcp.pop %v857
    %v863 = vmul.f32 1.0, %v862
    %v864 = vrcp.pop %v858
    %v865 = vmul.f32 1.0, %v864
    %v866 = vrcp.pop %v859
    %v867 = vmul.f32 1.0, %v866
    %v872 = vcombine.low %v861, %v863
    %v873 = vcombine.low %v865, %v867
    %v875 = vunpack.c.l.s4 1966171168
    %v876 = vunpack.c.0.s8 %v875
    %v877 = vlaneseq
    %v878 = vshrl.u32 %v877, 7
    %v879 = vsub.s32 %v876, %v878
    %v880 = vrot.slane %v872, %v879
    %v882 = vunpack.c.l.s4 1966171168
    %v883 = vunpack.c.0.s8 %v882
    %v884 = vlaneseq
    %v885 = vshrl.u32 %v884, 7
    %v886 = vsub.s32 %v883, %v885
    %v887 = vrot.slane %v873, %v886
    %v888 = vcombine.low %v880, %v887
    %v890 = vunpack.c.l.s4 1966171168
    %v891 = vunpack.c.0.s8 %v890
    %v892 = vlaneseq
    %v893 = vshrl.u32 %v892, 7
    %v894 = vsub.s32 %v891, %v893
    %v895 = vrot.slane %v888, %v894
    %v897 = vlaneseq
    %vm898 = vcmp.ge.s32.totalorder %v897, 0
    %vm899 = vcmp.lt.s32.totalorder %v897, 512
    %vm900 = vmand %vm898, %vm899
    %901 = vst.msk [vmem:[#allocation14] sm:$0xf] %vm900, %v895
    // Predicated region
    $region54: #{tpu_custom_call.1} parent=1 // pred_check
      _
    $region55: #{tpu_custom_call.1} parent=1 // pred_check_branch
      %903 = sbr.rel (0) target = $region57
    $region56: #{tpu_custom_call.1} parent=1 // pred_region
      %s905 = ssub.s32 64, 64
      %906 = vsyncadd [#allocation5], %s905
      %s908 = sshll.u32 [#allocation14], 4
      %s909 = int_to_ptr.vmem [resolvable:$true] %s908
      %911 = dma.vmem_to_hbm [thread:$0]  %s909, 64, %s7, [#allocation5]
    $region57: #{tpu_custom_call.1} parent=1 // pred_fallthru
      _
    // Predicated region
    $region58: #{tpu_custom_call.1} parent=1 // pred_check
      _
    $region59: #{tpu_custom_call.1} parent=1 // pred_check_branch
      %913 = sbr.rel (0) target = $region61
    $region60: #{tpu_custom_call.1} parent=1 // pred_region
      %914 = dma.done [#allocation5], 64
    $region61: #{tpu_custom_call.1} parent=1 // pred_fallthru
      _
    %915 = vsyncpa [#allocation4], 1
    %916 = vsyncpa [#allocation7], 1
    %917 = vsyncpa [#allocation10], 1
    %918 = vsyncpa [#allocation13], 1
    %919 = vsyncpa [#allocation5], 1

// kernel: tpu_custom_call.1
$region0: #{tpu_custom_call.1}
  #allocation0 [shape = 'u32[]', space=smem, size = 0x4, offset = 0x4, fixed_abs, tag = 'smem constant byte address 0x4 - core index']
  #allocation1 [shape = 'u32[144,128]{1,0:T(1,128)}', space=vmem, size = 0x12000, scoped, tag = 'internal scratch']
  #allocation2 [shape = 'f32[1,1]{1,0:T(1,128)S(1)}', space=vmem, size = 0x200, scoped, tag = 'scoped memory for tpu_custom_call.1']
  %s0 = inlined_call_operand.hbm [shape: f32[512,32], index: 0, kind: input, shape index: {}]
  %s1 = inlined_call_operand.hbm [shape: bf16[64,32], index: 1, kind: input, shape index: {}]
  %s2 = inlined_call_operand.hbm [shape: f32[64,1], index: 2, kind: input, shape index: {}]
  %s3 = inlined_call_operand.hbm [shape: bf16[32,64], index: 3, kind: input, shape index: {}]
  %s4 = inlined_call_operand.hbm [shape: f32[32,1], index: 4, kind: input, shape index: {}]
  %s5 = inlined_call_operand.hbm [shape: f32[32,1], index: 5, kind: input, shape index: {}]
  %s6 = inlined_call_operand.<no memory space> [shape: f32[1,1], index: 6, kind: input, shape index: {}]
  %s7 = inlined_call_operand.hbm [shape: f32[1,512], index: 7, kind: output, shape index: {}]
  %s8 = sld [smem:[#allocation0]]
  $region62: #{tpu_custom_call.1} parent=0
    _
  %s10 = ssub.s32 1, %s8
  %s11 = scalar_select 0, %s10, %s8
  %v12 = vstv %s6
  %13 = vst [vmem:[#allocation2] sm:$0x1] %v12
  $region1: #{tpu_custom_call.1} parent=0
    #allocation3 [shape = 'u8[262144]{0}', space=vmem, size = 0x40000, scoped, tag = 'input window, operand 0, single buffered']
    #allocation4 [shape = 's32[1]{0}', space=sflag, size = 0x4, scoped, tag = 'scoped memory for tpu_custom_call.1']
    #allocation5 [shape = 's32[1]{0}', space=sflag, size = 0x4, scoped, tag = 'scoped memory for tpu_custom_call.1']
    #allocation6 [shape = 'u8[16384]{0}', space=vmem, size = 0x4000, scoped, tag = 'input window, operand 1, single buffered']
    #allocation7 [shape = 's32[1]{0}', space=sflag, size = 0x4, scoped, tag = 'scoped memory for tpu_custom_call.1']
    #allocation8 [shape = 'u8[32768]{0}', space=vmem, size = 0x8000, scoped, tag = 'input window, operand 2, single buffered']
    #allocation9 [shape = 'u8[8192]{0}', space=vmem, size = 0x2000, scoped, tag = 'input window, operand 3, single buffered']
    #allocation10 [shape = 's32[1]{0}', space=sflag, size = 0x4, scoped, tag = 'scoped memory for tpu_custom_call.1']
    #allocation11 [shape = 'u8[16384]{0}', space=vmem, size = 0x4000, scoped, tag = 'input window, operand 4, single buffered']
    #allocation12 [shape = 'u8[16384]{0}', space=vmem, size = 0x4000, scoped, tag = 'input window, operand 5, single buffered']
    #allocation13 [shape = 's32[1]{0}', space=sflag, size = 0x4, scoped, tag = 'scoped memory for tpu_custom_call.1']
    #allocation14 [shape = 'u8[2048]{0}', space=vmem, size = 0x800, scoped, tag = 'output window, operand 0, single buffered']
    %14 = vsyncpa [#allocation4], 0
    %15 = vsyncpa [#allocation7], 0
    %16 = vsyncpa [#allocation10], 0
    %17 = vsyncpa [#allocation13], 0
    %18 = vsyncpa [#allocation5], 0
    // Predicated region
    $region2: #{tpu_custom_call.1} parent=1 // pred_check
      _
    $region3: #{tpu_custom_call.1} parent=1 // pred_check_branch
      %20 = sbr.rel (0) target = $region5
    $region4: #{tpu_custom_call.1} parent=1 // pred_region
      %s22 = ssub.s32 8192, 8192
      %23 = vsyncadd [#allocation4], %s22
      %s24 = sshll.u32 [#allocation3], 4
      %s25 = int_to_ptr.vmem [resolvable:$true] %s24
      %30 = dma.hbm_to_vmem [thread:$0]  %s0, 8192, %s25, [#allocation4], 128, 128, 8
    $region5: #{tpu_custom_call.1} parent=1 // pred_fallthru
      _
    // Predicated region
    $region6: #{tpu_custom_call.1} parent=1 // pred_check
      _
    $region7: #{tpu_custom_call.1} parent=1 // pred_check_branch
      %32 = sbr.rel (0) target = $region9
    $region8: #{tpu_custom_call.1} parent=1 // pred_region
      %s34 = ssub.s32 512, 512
      %35 = vsyncadd [#allocation7], %s34
      %s36 = sshll.u32 [#allocation6], 4
      %s37 = int_to_ptr.vmem [resolvable:$true] %s36
      %42 = dma.hbm_to_vmem [thread:$0]  %s1, 512, %s37, [#allocation7], 64, 64, 4
    $region9: #{tpu_custom_call.1} parent=1 // pred_fallthru
      _
    // Predicated region
    $region10: #{tpu_custom_call.1} parent=1 // pred_check
      _
    $region11: #{tpu_custom_call.1} parent=1 // pred_check_branch
      %44 = sbr.rel (0) target = $region13
    $region12: #{tpu_custom_call.1} parent=1 // pred_region
      %s46 = ssub.s32 1024, 1024
      %47 = vsyncadd [#allocation7], %s46
      %s48 = sshll.u32 [#allocation8], 4
      %s49 = int_to_ptr.vmem [resolvable:$true] %s48
      %54 = dma.hbm_to_vmem [thread:$0]  %s2, 1024, %s49, [#allocation7], 128, 128, 8
    $region13: #{tpu_custom_call.1} parent=1 // pred_fallthru
      _
    // Predicated region
    $region14: #{tpu_custom_call.1} parent=1 // pred_check
      _
    $region15: #{tpu_custom_call.1} parent=1 // pred_check_branch
      %56 = sbr.rel (0) target = $region17
    $region16: #{tpu_custom_call.1} parent=1 // pred_region
      %s58 = ssub.s32 256, 256
      %59 = vsyncadd [#allocation10], %s58
      %s60 = sshll.u32 [#allocation9], 4
      %s61 = int_to_ptr.vmem [resolvable:$true] %s60
      %66 = dma.hbm_to_vmem [thread:$0]  %s3, 256, %s61, [#allocation10], 64, 64, 4
    $region17: #{tpu_custom_call.1} parent=1 // pred_fallthru
      _
    // Predicated region
    $region18: #{tpu_custom_call.1} parent=1 // pred_check
      _
    $region19: #{tpu_custom_call.1} parent=1 // pred_check_branch
      %68 = sbr.rel (0) target = $region21
    $region20: #{tpu_custom_call.1} parent=1 // pred_region
      %s70 = ssub.s32 512, 512
      %71 = vsyncadd [#allocation10], %s70
      %s72 = sshll.u32 [#allocation11], 4
      %s73 = int_to_ptr.vmem [resolvable:$true] %s72
      %78 = dma.hbm_to_vmem [thread:$0]  %s4, 512, %s73, [#allocation10], 128, 128, 8
    $region21: #{tpu_custom_call.1} parent=1 // pred_fallthru
      _
    // Predicated region
    $region22: #{tpu_custom_call.1} parent=1 // pred_check
      _
    $region23: #{tpu_custom_call.1} parent=1 // pred_check_branch
      %80 = sbr.rel (0) target = $region25
    $region24: #{tpu_custom_call.1} parent=1 // pred_region
      %s82 = ssub.s32 512, 512
      %83 = vsyncadd [#allocation13], %s82
      %s84 = sshll.u32 [#allocation12], 4
      %s85 = int_to_ptr.vmem [resolvable:$true] %s84
      %90 = dma.hbm_to_vmem [thread:$0]  %s5, 512, %s85, [#allocation13], 128, 128, 8
    $region25: #{tpu_custom_call.1} parent=1 // pred_fallthru
      _
    // Predicated region
    $region26: #{tpu_custom_call.1} parent=1 // pred_check
      _
    $region27: #{tpu_custom_call.1} parent=1 // pred_check_branch
      %92 = sbr.rel (0) target = $region29
    $region28: #{tpu_custom_call.1} parent=1 // pred_region
      _
    $region29: #{tpu_custom_call.1} parent=1 // pred_fallthru
      _
    // Predicated region
    $region30: #{tpu_custom_call.1} parent=1 // pred_check
      _
    $region31: #{tpu_custom_call.1} parent=1 // pred_check_branch
      %94 = sbr.rel (0) target = $region33
    $region32: #{tpu_custom_call.1} parent=1 // pred_region
      %95 = dma.done [#allocation4], 8192
    $region33: #{tpu_custom_call.1} parent=1 // pred_fallthru
      _
    // Predicated region
    $region34: #{tpu_custom_call.1} parent=1 // pred_check
      _
    $region35: #{tpu_custom_call.1} parent=1 // pred_check_branch
      %97 = sbr.rel (0) target = $region37
    $region36: #{tpu_custom_call.1} parent=1 // pred_region
      %98 = dma.done [#allocation7], 512
    $region37: #{tpu_custom_call.1} parent=1 // pred_fallthru
      _
    // Predicated region
    $region38: #{tpu_custom_call.1} parent=1 // pred_check
      _
    $region39: #{tpu_custom_call.1} parent=1 // pred_check_branch
      %100 = sbr.rel (0) target = $region41
    $region40: #{tpu_custom_call.1} parent=1 // pred_region
      %101 = dma.done [#allocation7], 1024
    $region41: #{tpu_custom_call.1} parent=1 // pred_fallthru
      _
    // Predicated region
    $region42: #{tpu_custom_call.1} parent=1 // pred_check
      _
    $region43: #{tpu_custom_call.1} parent=1 // pred_check_branch
      %103 = sbr.rel (0) target = $region45
    $region44: #{tpu_custom_call.1} parent=1 // pred_region
      %104 = dma.done [#allocation10], 256
    $region45: #{tpu_custom_call.1} parent=1 // pred_fallthru
      _
    // Predicated region
    $region46: #{tpu_custom_call.1} parent=1 // pred_check
      _
    $region47: #{tpu_custom_call.1} parent=1 // pred_check_branch
      %106 = sbr.rel (0) target = $region49
    $region48: #{tpu_custom_call.1} parent=1 // pred_region
      %107 = dma.done [#allocation10], 512
    $region49: #{tpu_custom_call.1} parent=1 // pred_fallthru
      _
    // Predicated region
    $region50: #{tpu_custom_call.1} parent=1 // pred_check
      _
    $region51: #{tpu_custom_call.1} parent=1 // pred_check_branch
      %109 = sbr.rel (0) target = $region53
    $region52: #{tpu_custom_call.1} parent=1 // pred_region
      %110 = dma.done [#allocation13], 512
    $region53: #{tpu_custom_call.1} parent=1 // pred_fallthru
      _
    %v112 = vld [vmem:[#allocation3] sm:$0xff]
    %v113 = vld [vmem:[#allocation3 + $0x8] sm:$0xff]
    %v114 = vld [vmem:[#allocation3 + $0x10] sm:$0xff]
    %v115 = vld [vmem:[#allocation3 + $0x18] sm:$0xff]
    %v116 = vld [vmem:[#allocation3 + $0x20] sm:$0xff]
    %v117 = vld [vmem:[#allocation3 + $0x28] sm:$0xff]
    %v118 = vld [vmem:[#allocation3 + $0x30] sm:$0xff]
    %v119 = vld [vmem:[#allocation3 + $0x38] sm:$0xff]
    %v120 = vld [vmem:[#allocation3 + $0x40] sm:$0xff]
    %v121 = vld [vmem:[#allocation3 + $0x48] sm:$0xff]
    %v122 = vld [vmem:[#allocation3 + $0x50] sm:$0xff]
    %v123 = vld [vmem:[#allocation3 + $0x58] sm:$0xff]
    %v124 = vld [vmem:[#allocation3 + $0x60] sm:$0xff]
    %v125 = vld [vmem:[#allocation3 + $0x68] sm:$0xff]
    %v126 = vld [vmem:[#allocation3 + $0x70] sm:$0xff]
    %v127 = vld [vmem:[#allocation3 + $0x78] sm:$0xff]
    %v128 = vld [vmem:[#allocation3 + $0x80] sm:$0xff]
    %v129 = vld [vmem:[#allocation3 + $0x88] sm:$0xff]
    %v130 = vld [vmem:[#allocation3 + $0x90] sm:$0xff]
    %v131 = vld [vmem:[#allocation3 + $0x98] sm:$0xff]
    %v132 = vld [vmem:[#allocation3 + $0xa0] sm:$0xff]
    %v133 = vld [vmem:[#allocation3 + $0xa8] sm:$0xff]
    %v134 = vld [vmem:[#allocation3 + $0xb0] sm:$0xff]
    %v135 = vld [vmem:[#allocation3 + $0xb8] sm:$0xff]
    %v136 = vld [vmem:[#allocation3 + $0xc0] sm:$0xff]
    %v137 = vld [vmem:[#allocation3 + $0xc8] sm:$0xff]
    %v138 = vld [vmem:[#allocation3 + $0xd0] sm:$0xff]
    %v139 = vld [vmem:[#allocation3 + $0xd8] sm:$0xff]
    %v140 = vld [vmem:[#allocation3 + $0xe0] sm:$0xff]
    %v141 = vld [vmem:[#allocation3 + $0xe8] sm:$0xff]
    %v142 = vld [vmem:[#allocation3 + $0xf0] sm:$0xff]
    %v143 = vld [vmem:[#allocation3 + $0xf8] sm:$0xff]
    %v144 = vld [vmem:[#allocation3 + $0x100] sm:$0xff]
    %v145 = vld [vmem:[#allocation3 + $0x108] sm:$0xff]
    %v146 = vld [vmem:[#allocation3 + $0x110] sm:$0xff]
    %v147 = vld [vmem:[#allocation3 + $0x118] sm:$0xff]
    %v148 = vld [vmem:[#allocation3 + $0x120] sm:$0xff]
    %v149 = vld [vmem:[#allocation3 + $0x128] sm:$0xff]
    %v150 = vld [vmem:[#allocation3 + $0x130] sm:$0xff]
    %v151 = vld [vmem:[#allocation3 + $0x138] sm:$0xff]
    %v152 = vld [vmem:[#allocation3 + $0x140] sm:$0xff]
    %v153 = vld [vmem:[#allocation3 + $0x148] sm:$0xff]
    %v154 = vld [vmem:[#allocation3 + $0x150] sm:$0xff]
    %v155 = vld [vmem:[#allocation3 + $0x158] sm:$0xff]
    %v156 = vld [vmem:[#allocation3 + $0x160] sm:$0xff]
    %v157 = vld [vmem:[#allocation3 + $0x168] sm:$0xff]
    %v158 = vld [vmem:[#allocation3 + $0x170] sm:$0xff]
    %v159 = vld [vmem:[#allocation3 + $0x178] sm:$0xff]
    %v160 = vld [vmem:[#allocation3 + $0x180] sm:$0xff]
    %v161 = vld [vmem:[#allocation3 + $0x188] sm:$0xff]
    %v162 = vld [vmem:[#allocation3 + $0x190] sm:$0xff]
    %v163 = vld [vmem:[#allocation3 + $0x198] sm:$0xff]
    %v164 = vld [vmem:[#allocation3 + $0x1a0] sm:$0xff]
    %v165 = vld [vmem:[#allocation3 + $0x1a8] sm:$0xff]
    %v166 = vld [vmem:[#allocation3 + $0x1b0] sm:$0xff]
    %v167 = vld [vmem:[#allocation3 + $0x1b8] sm:$0xff]
    %v168 = vld [vmem:[#allocation3 + $0x1c0] sm:$0xff]
    %v169 = vld [vmem:[#allocation3 + $0x1c8] sm:$0xff]
    %v170 = vld [vmem:[#allocation3 + $0x1d0] sm:$0xff]
    %v171 = vld [vmem:[#allocation3 + $0x1d8] sm:$0xff]
    %v172 = vld [vmem:[#allocation3 + $0x1e0] sm:$0xff]
    %v173 = vld [vmem:[#allocation3 + $0x1e8] sm:$0xff]
    %v174 = vld [vmem:[#allocation3 + $0x1f0] sm:$0xff]
    %v175 = vld [vmem:[#allocation3 + $0x1f8] sm:$0xff]
    %v176 = vpack.c.bf16 %v113, %v112
    %v177 = vpack.c.bf16 %v115, %v114
    %v178 = vpack.c.bf16 %v117, %v116
    %v179 = vpack.c.bf16 %v119, %v118
    %v180 = vpack.c.bf16 %v121, %v120
    %v181 = vpack.c.bf16 %v123, %v122
    %v182 = vpack.c.bf16 %v125, %v124
    %v183 = vpack.c.bf16 %v127, %v126
    %v184 = vpack.c.bf16 %v129, %v128
    %v185 = vpack.c.bf16 %v131, %v130
    %v186 = vpack.c.bf16 %v133, %v132
    %v187 = vpack.c.bf16 %v135, %v134
    %v188 = vpack.c.bf16 %v137, %v136
    %v189 = vpack.c.bf16 %v139, %v138
    %v190 = vpack.c.bf16 %v141, %v140
    %v191 = vpack.c.bf16 %v143, %v142
    %v192 = vpack.c.bf16 %v145, %v144
    %v193 = vpack.c.bf16 %v147, %v146
    %v194 = vpack.c.bf16 %v149, %v148
    %v195 = vpack.c.bf16 %v151, %v150
    %v196 = vpack.c.bf16 %v153, %v152
    %v197 = vpack.c.bf16 %v155, %v154
    %v198 = vpack.c.bf16 %v157, %v156
    %v199 = vpack.c.bf16 %v159, %v158
    %v200 = vpack.c.bf16 %v161, %v160
    %v201 = vpack.c.bf16 %v163, %v162
    %v202 = vpack.c.bf16 %v165, %v164
    %v203 = vpack.c.bf16 %v167, %v166
    %v204 = vpack.c.bf16 %v169, %v168
    %v205 = vpack.c.bf16 %v171, %v170
    %v206 = vpack.c.bf16 %v173, %v172
    %v207 = vpack.c.bf16 %v175, %v174
    %v208 = vld [vmem:[#allocation6] sm:$0xf]
    %v209 = vld [vmem:[#allocation6 + $0x4] sm:$0xf]
    %v210 = vld [vmem:[#allocation6 + $0x8] sm:$0xf]
    %v211 = vld [vmem:[#allocation6 + $0xc] sm:$0xf]
    %v212 = vld [vmem:[#allocation6 + $0x10] sm:$0xf]
    %v213 = vld [vmem:[#allocation6 + $0x14] sm:$0xf]
    %v214 = vld [vmem:[#allocation6 + $0x18] sm:$0xf]
    %v215 = vld [vmem:[#allocation6 + $0x1c] sm:$0xf]
    %v216 = vld [vmem:[#allocation8] sm:$0xff]
    %v217 = vld [vmem:[#allocation8 + $0x8] sm:$0xff]
    %v218 = vld [vmem:[#allocation8 + $0x10] sm:$0xff]
    %v219 = vld [vmem:[#allocation8 + $0x18] sm:$0xff]
    %v220 = vld [vmem:[#allocation8 + $0x20] sm:$0xff]
    %v221 = vld [vmem:[#allocation8 + $0x28] sm:$0xff]
    %v222 = vld [vmem:[#allocation8 + $0x30] sm:$0xff]
    %v223 = vld [vmem:[#allocation8 + $0x38] sm:$0xff]
    %225 = vset.pattern.permute.xlu0 0
    %226 = vperm.xlu0 %225, %v216
    %v227 = vpop.permute.xlu0 %226
    %230 = vset.pattern.permute.xlu0 0
    %231 = vperm.xlu0 %230, %v217
    %v232 = vpop.permute.xlu0 %231
    %235 = vset.pattern.permute.xlu0 0
    %236 = vperm.xlu0 %235, %v218
    %v237 = vpop.permute.xlu0 %236
    %240 = vset.pattern.permute.xlu0 0
    %241 = vperm.xlu0 %240, %v219
    %v242 = vpop.permute.xlu0 %241
    %245 = vset.pattern.permute.xlu0 0
    %246 = vperm.xlu0 %245, %v220
    %v247 = vpop.permute.xlu0 %246
    %250 = vset.pattern.permute.xlu0 0
    %251 = vperm.xlu0 %250, %v221
    %v252 = vpop.permute.xlu0 %251
    %255 = vset.pattern.permute.xlu0 0
    %256 = vperm.xlu0 %255, %v222
    %v257 = vpop.permute.xlu0 %256
    %260 = vset.pattern.permute.xlu0 0
    %261 = vperm.xlu0 %260, %v223
    %v262 = vpop.permute.xlu0 %261
    %v272 = vunpack.c.l.b16 %v208
    %v273 = vunpack.c.l.b16 %v209
    %v274 = vunpack.c.l.b16 %v210
    %v275 = vunpack.c.l.b16 %v211
    %v276 = vunpack.c.l.b16 %v212
    %v277 = vunpack.c.l.b16 %v213
    %v278 = vunpack.c.l.b16 %v214
    %v279 = vunpack.c.l.b16 %v215
    %v280 = vpack.c.b16 %v273, %v272
    %v281 = vpack.c.b16 %v275, %v274
    %v282 = vpack.c.b16 %v277, %v276
    %v283 = vpack.c.b16 %v279, %v278
    %vm284 = vcmask 261120
    %v286 = vsel %vm284, %v280, 0
    %v289 = vsel %vm284, %v281, 0
    %v292 = vsel %vm284, %v282, 0
    %v295 = vsel %vm284, %v283, 0
    %v298 = vsel %vm284, %v176, 0
    %v301 = vsel %vm284, %v177, 0
    %v304 = vsel %vm284, %v178, 0
    %v307 = vsel %vm284, %v179, 0
    %v310 = vsel %vm284, %v180, 0
    %v313 = vsel %vm284, %v181, 0
    %v316 = vsel %vm284, %v182, 0
    %v319 = vsel %vm284, %v183, 0
    %v322 = vsel %vm284, %v184, 0
    %v325 = vsel %vm284, %v185, 0
    %v328 = vsel %vm284, %v186, 0
    %v331 = vsel %vm284, %v187, 0
    %v334 = vsel %vm284, %v188, 0
    %v337 = vsel %vm284, %v189, 0
    %v340 = vsel %vm284, %v190, 0
    %v343 = vsel %vm284, %v191, 0
    %v346 = vsel %vm284, %v192, 0
    %v349 = vsel %vm284, %v193, 0
    %v352 = vsel %vm284, %v194, 0
    %v355 = vsel %vm284, %v195, 0
    %v358 = vsel %vm284, %v196, 0
    %v361 = vsel %vm284, %v197, 0
    %v364 = vsel %vm284, %v198, 0
    %v367 = vsel %vm284, %v199, 0
    %v370 = vsel %vm284, %v200, 0
    %v373 = vsel %vm284, %v201, 0
    %v376 = vsel %vm284, %v202, 0
    %v379 = vsel %vm284, %v203, 0
    %v382 = vsel %vm284, %v204, 0
    %v385 = vsel %vm284, %v205, 0
    %v388 = vsel %vm284, %v206, 0
    %v391 = vsel %vm284, %v207, 0
    %393 = vmatprep.subr.bf16.mxu0 0
    %394 = vmatpush1.bf16.xpose.msra.mxu0 %v298
    %395 = vmatprep.subr.bf16.mxu0 0
    %396 = vmatpush1.bf16.xpose.msra.mxu0 %v301
    %397 = vmatprep.subr.bf16.mxu0 0
    %398 = vmatpush1.bf16.xpose.msra.mxu0 %v304
    %399 = vmatprep.subr.bf16.mxu0 0
    %400 = vmatpush1.bf16.xpose.msra.mxu0 %v307
    %401 = vmatprep.subr.bf16.mxu0 0
    %402 = vmatpush1.bf16.xpose.msra.mxu0 %v310
    %403 = vmatprep.subr.bf16.mxu0 0
    %404 = vmatpush1.bf16.xpose.msra.mxu0 %v313
    %405 = vmatprep.subr.bf16.mxu0 0
    %406 = vmatpush1.bf16.xpose.msra.mxu0 %v316
    %407 = vmatprep.subr.bf16.mxu0 0
    %408 = vmatpush1.bf16.xpose.msra.mxu0 %v319
    %409 = vmatprep.subr.bf16.mxu0 0
    %410 = vmatpush1.bf16.xpose.msra.mxu0 %v322
    %411 = vmatprep.subr.bf16.mxu0 0
    %412 = vmatpush1.bf16.xpose.msra.mxu0 %v325
    %413 = vmatprep.subr.bf16.mxu0 0
    %414 = vmatpush1.bf16.xpose.msra.mxu0 %v328
    %415 = vmatprep.subr.bf16.mxu0 0
    %416 = vmatpush1.bf16.xpose.msra.mxu0 %v331
    %417 = vmatprep.subr.bf16.mxu0 0
    %418 = vmatpush1.bf16.xpose.msra.mxu0 %v334
    %419 = vmatprep.subr.bf16.mxu0 0
    %420 = vmatpush1.bf16.xpose.msra.mxu0 %v337
    %421 = vmatprep.subr.bf16.mxu0 0
    %422 = vmatpush1.bf16.xpose.msra.mxu0 %v340
    %423 = vmatprep.subr.bf16.mxu0 0
    %424 = vmatpush1.bf16.xpose.msra.mxu0 %v343
    %425 = vmatprep.mubr.bf16.mxu0 0
    %426 = vmatmul.mubr.bf16.gmra.mrb[0].mxu0 %v286
    %v427 = vpop.f32.mrb[0].mxu0
    %v428 = vadd.f32 %v227, %v427
    %v429 = vpop.f32.mrb[0].mxu0
    %v430 = vadd.f32 %v227, %v429
    %v431 = vpop.f32.mrb[0].mxu0
    %v432 = vadd.f32 %v232, %v431
    %v433 = vpop.f32.mrb[0].mxu0
    %v434 = vadd.f32 %v232, %v433
    %435 = vmatprep.mubr.bf16.mxu0 0
    %436 = vmatmul.mubr.bf16.gmra.mrb[0].mxu0 %v289
    %v437 = vpop.f32.mrb[0].mxu0
    %v438 = vadd.f32 %v237, %v437
    %v439 = vpop.f32.mrb[0].mxu0
    %v440 = vadd.f32 %v237, %v439
    %v441 = vpop.f32.mrb[0].mxu0
    %v442 = vadd.f32 %v242, %v441
    %v443 = vpop.f32.mrb[0].mxu0
    %v444 = vadd.f32 %v242, %v443
    %445 = vmatprep.mubr.bf16.mxu0 0
    %446 = vmatmul.mubr.bf16.gmra.mrb[0].mxu0 %v292
    %v447 = vpop.f32.mrb[0].mxu0
    %v448 = vadd.f32 %v247, %v447
    %v449 = vpop.f32.mrb[0].mxu0
    %v450 = vadd.f32 %v247, %v449
    %v451 = vpop.f32.mrb[0].mxu0
    %v452 = vadd.f32 %v252, %v451
    %v453 = vpop.f32.mrb[0].mxu0
    %v454 = vadd.f32 %v252, %v453
    %455 = vmatprep.mubr.bf16.mxu0 0
    %456 = vmatmul.mubr.bf16.gmra.mrb[0].mxu0 %v295
    %v457 = vpop.f32.mrb[0].mxu0
    %v458 = vadd.f32 %v257, %v457
    %v459 = vpop.f32.mrb[0].mxu0
    %v460 = vadd.f32 %v257, %v459
    %v461 = vpop.f32.mrb[0].mxu0
    %v462 = vadd.f32 %v262, %v461
    %v463 = vpop.f32.mrb[0].mxu0
    %v464 = vadd.f32 %v262, %v463
    %465 = vdwg.mxu0
    %466 = vmatprep.subr.bf16.mxu0 0
    %467 = vmatpush1.bf16.xpose.msra.mxu0 %v346
    %468 = vmatprep.subr.bf16.mxu0 0
    %469 = vmatpush1.bf16.xpose.msra.mxu0 %v349
    %470 = vmatprep.subr.bf16.mxu0 0
    %471 = vmatpush1.bf16.xpose.msra.mxu0 %v352
    %472 = vmatprep.subr.bf16.mxu0 0
    %473 = vmatpush1.bf16.xpose.msra.mxu0 %v355
    %474 = vmatprep.subr.bf16.mxu0 0
    %475 = vmatpush1.bf16.xpose.msra.mxu0 %v358
    %476 = vmatprep.subr.bf16.mxu0 0
    %477 = vmatpush1.bf16.xpose.msra.mxu0 %v361
    %478 = vmatprep.subr.bf16.mxu0 0
    %479 = vmatpush1.bf16.xpose.msra.mxu0 %v364
    %480 = vmatprep.subr.bf16.mxu0 0
    %481 = vmatpush1.bf16.xpose.msra.mxu0 %v367
    %482 = vmatprep.subr.bf16.mxu0 0
    %483 = vmatpush1.bf16.xpose.msra.mxu0 %v370
    %484 = vmatprep.subr.bf16.mxu0 0
    %485 = vmatpush1.bf16.xpose.msra.mxu0 %v373
    %486 = vmatprep.subr.bf16.mxu0 0
    %487 = vmatpush1.bf16.xpose.msra.mxu0 %v376
    %488 = vmatprep.subr.bf16.mxu0 0
    %489 = vmatpush1.bf16.xpose.msra.mxu0 %v379
    %490 = vmatprep.subr.bf16.mxu0 0
    %491 = vmatpush1.bf16.xpose.msra.mxu0 %v382
    %492 = vmatprep.subr.bf16.mxu0 0
    %493 = vmatpush1.bf16.xpose.msra.mxu0 %v385
    %494 = vmatprep.subr.bf16.mxu0 0
    %495 = vmatpush1.bf16.xpose.msra.mxu0 %v388
    %496 = vmatprep.subr.bf16.mxu0 0
    %497 = vmatpush1.bf16.xpose.msra.mxu0 %v391
    %498 = vmatprep.mubr.bf16.mxu0 0
    %499 = vmatmul.mubr.bf16.gmra.mrb[0].mxu0 %v286
    %v500 = vpop.f32.mrb[0].mxu0
    %v501 = vadd.f32 %v227, %v500
    %v502 = vpop.f32.mrb[0].mxu0
    %v503 = vadd.f32 %v227, %v502
    %v504 = vpop.f32.mrb[0].mxu0
    %v505 = vadd.f32 %v232, %v504
    %v506 = vpop.f32.mrb[0].mxu0
    %v507 = vadd.f32 %v232, %v506
    %508 = vmatprep.mubr.bf16.mxu0 0
    %509 = vmatmul.mubr.bf16.gmra.mrb[0].mxu0 %v289
    %v510 = vpop.f32.mrb[0].mxu0
    %v511 = vadd.f32 %v237, %v510
    %v512 = vpop.f32.mrb[0].mxu0
    %v513 = vadd.f32 %v237, %v512
    %v514 = vpop.f32.mrb[0].mxu0
    %v515 = vadd.f32 %v242, %v514
    %v516 = vpop.f32.mrb[0].mxu0
    %v517 = vadd.f32 %v242, %v516
    %518 = vmatprep.mubr.bf16.mxu0 0
    %519 = vmatmul.mubr.bf16.gmra.mrb[0].mxu0 %v292
    %v520 = vpop.f32.mrb[0].mxu0
    %v521 = vadd.f32 %v247, %v520
    %v522 = vpop.f32.mrb[0].mxu0
    %v523 = vadd.f32 %v247, %v522
    %v524 = vpop.f32.mrb[0].mxu0
    %v525 = vadd.f32 %v252, %v524
    %v526 = vpop.f32.mrb[0].mxu0
    %v527 = vadd.f32 %v252, %v526
    %528 = vmatprep.mubr.bf16.mxu0 0
    %529 = vmatmul.mubr.bf16.gmra.mrb[0].mxu0 %v295
    %v530 = vpop.f32.mrb[0].mxu0
    %v531 = vadd.f32 %v257, %v530
    %v532 = vpop.f32.mrb[0].mxu0
    %v533 = vadd.f32 %v257, %v532
    %v534 = vpop.f32.mrb[0].mxu0
    %v535 = vadd.f32 %v262, %v534
    %v536 = vpop.f32.mrb[0].mxu0
    %v537 = vadd.f32 %v262, %v536
    %538 = vdwg.mxu0
    %v539 = vmax.f32 %v428, 0.0
    %v540 = vmax.f32 %v430, 0.0
    %v541 = vmax.f32 %v501, 0.0
    %v542 = vmax.f32 %v503, 0.0
    %v543 = vmax.f32 %v432, 0.0
    %v544 = vmax.f32 %v434, 0.0
    %v545 = vmax.f32 %v505, 0.0
    %v546 = vmax.f32 %v507, 0.0
    %v547 = vmax.f32 %v438, 0.0
    %v548 = vmax.f32 %v440, 0.0
    %v549 = vmax.f32 %v511, 0.0
    %v550 = vmax.f32 %v513, 0.0
    %v551 = vmax.f32 %v442, 0.0
    %v552 = vmax.f32 %v444, 0.0
    %v553 = vmax.f32 %v515, 0.0
    %v554 = vmax.f32 %v517, 0.0
    %v555 = vmax.f32 %v448, 0.0
    %v556 = vmax.f32 %v450, 0.0
    %v557 = vmax.f32 %v521, 0.0
    %v558 = vmax.f32 %v523, 0.0
    %v559 = vmax.f32 %v452, 0.0
    %v560 = vmax.f32 %v454, 0.0
    %v561 = vmax.f32 %v525, 0.0
    %v562 = vmax.f32 %v527, 0.0
    %v563 = vmax.f32 %v458, 0.0
    %v564 = vmax.f32 %v460, 0.0
    %v565 = vmax.f32 %v531, 0.0
    %v566 = vmax.f32 %v533, 0.0
    %v567 = vmax.f32 %v462, 0.0
    %v568 = vmax.f32 %v464, 0.0
    %v569 = vmax.f32 %v535, 0.0
    %v570 = vmax.f32 %v537, 0.0
    %v571 = vld [vmem:[#allocation9] sm:$0xf]
    %v572 = vld [vmem:[#allocation9 + $0x4] sm:$0xf]
    %v573 = vld [vmem:[#allocation9 + $0x8] sm:$0xf]
    %v574 = vld [vmem:[#allocation9 + $0xc] sm:$0xf]
    %v575 = vpack.c.bf16 %v543, %v539
    %v576 = vpack.c.bf16 %v544, %v540
    %v577 = vpack.c.bf16 %v545, %v541
    %v578 = vpack.c.bf16 %v546, %v542
    %v579 = vpack.c.bf16 %v551, %v547
    %v580 = vpack.c.bf16 %v552, %v548
    %v581 = vpack.c.bf16 %v553, %v549
    %v582 = vpack.c.bf16 %v554, %v550
    %v583 = vpack.c.bf16 %v559, %v555
    %v584 = vpack.c.bf16 %v560, %v556
    %v585 = vpack.c.bf16 %v561, %v557
    %v586 = vpack.c.bf16 %v562, %v558
    %v587 = vpack.c.bf16 %v567, %v563
    %v588 = vpack.c.bf16 %v568, %v564
    %v589 = vpack.c.bf16 %v569, %v565
    %v590 = vpack.c.bf16 %v570, %v566
    %v591 = vld [vmem:[#allocation11] sm:$0xff]
    %v592 = vld [vmem:[#allocation11 + $0x8] sm:$0xff]
    %v593 = vld [vmem:[#allocation11 + $0x10] sm:$0xff]
    %v594 = vld [vmem:[#allocation11 + $0x18] sm:$0xff]
    %596 = vset.pattern.permute.xlu0 0
    %597 = vperm.xlu0 %596, %v591
    %v598 = vpop.permute.xlu0 %597
    %601 = vset.pattern.permute.xlu0 0
    %602 = vperm.xlu0 %601, %v592
    %v603 = vpop.permute.xlu0 %602
    %606 = vset.pattern.permute.xlu0 0
    %607 = vperm.xlu0 %606, %v593
    %v608 = vpop.permute.xlu0 %607
    %611 = vset.pattern.permute.xlu0 0
    %612 = vperm.xlu0 %611, %v594
    %v613 = vpop.permute.xlu0 %612
    %v619 = vunpack.c.l.b16 %v571
    %v620 = vunpack.c.l.b16 %v572
    %v621 = vunpack.c.l.b16 %v573
    %v622 = vunpack.c.l.b16 %v574
    %v623 = vpack.c.b16 %v620, %v619
    %v624 = vpack.c.b16 %v622, %v621
    %vm625 = vcmask 523264
    %v627 = vsel %vm625, %v623, 0
    %v630 = vsel %vm625, %v624, 0
    %632 = vmatprep.subr.bf16.mxu0 %v576
    %633 = vmatpush1.bf16.msra.mxu0 %v575
    %634 = vmatprep.subr.bf16.mxu0 %v580
    %635 = vmatpush1.bf16.msra.mxu0 %v579
    %636 = vmatprep.subr.bf16.mxu0 %v584
    %637 = vmatpush1.bf16.msra.mxu0 %v583
    %638 = vmatprep.subr.bf16.mxu0 %v588
    %639 = vmatpush1.bf16.msra.mxu0 %v587
    %640 = vmatprep.subr.bf16.mxu0 0
    %641 = vmatpush1.bf16.msra.mxu0 0
    %642 = vmatprep.subr.bf16.mxu0 0
    %643 = vmatpush1.bf16.msra.mxu0 0
    %644 = vmatprep.subr.bf16.mxu0 0
    %645 = vmatpush1.bf16.msra.mxu0 0
    %646 = vmatprep.subr.bf16.mxu0 0
    %647 = vmatpush1.bf16.msra.mxu0 0
    %648 = vmatprep.subr.bf16.mxu0 0
    %649 = vmatpush1.bf16.msra.mxu0 0
    %650 = vmatprep.subr.bf16.mxu0 0
    %651 = vmatpush1.bf16.msra.mxu0 0
    %652 = vmatprep.subr.bf16.mxu0 0
    %653 = vmatpush1.bf16.msra.mxu0 0
    %654 = vmatprep.subr.bf16.mxu0 0
    %655 = vmatpush1.bf16.msra.mxu0 0
    %656 = vmatprep.subr.bf16.mxu0 0
    %657 = vmatpush1.bf16.msra.mxu0 0
    %658 = vmatprep.subr.bf16.mxu0 0
    %659 = vmatpush1.bf16.msra.mxu0 0
    %660 = vmatprep.subr.bf16.mxu0 0
    %661 = vmatpush1.bf16.msra.mxu0 0
    %662 = vmatprep.subr.bf16.mxu0 0
    %663 = vmatpush1.bf16.msra.mxu0 0
    %664 = vmatprep.mubr.bf16.mxu0 0
    %665 = vmatmul.mubr.bf16.gmra.mrb[0].mxu0 %v627
    %v666 = vpop.f32.mrb[0].mxu0
    %v667 = vadd.f32 %v598, %v666
    %v668 = vpop.f32.mrb[0].mxu0
    %v669 = vadd.f32 %v598, %v668
    %v670 = vpop.f32.mrb[0].mxu0
    %v671 = vadd.f32 %v603, %v670
    %v672 = vpop.f32.mrb[0].mxu0
    %v673 = vadd.f32 %v603, %v672
    %674 = vmatprep.mubr.bf16.mxu0 0
    %675 = vmatmul.mubr.bf16.gmra.mrb[0].mxu0 %v630
    %v676 = vpop.f32.mrb[0].mxu0
    %v677 = vadd.f32 %v608, %v676
    %v678 = vpop.f32.mrb[0].mxu0
    %v679 = vadd.f32 %v608, %v678
    %v680 = vpop.f32.mrb[0].mxu0
    %v681 = vadd.f32 %v613, %v680
    %v682 = vpop.f32.mrb[0].mxu0
    %v683 = vadd.f32 %v613, %v682
    %684 = vdwg.mxu0
    %685 = vmatprep.subr.bf16.mxu0 %v578
    %686 = vmatpush1.bf16.msra.mxu0 %v577
    %687 = vmatprep.subr.bf16.mxu0 %v582
    %688 = vmatpush1.bf16.msra.mxu0 %v581
    %689 = vmatprep.subr.bf16.mxu0 %v586
    %690 = vmatpush1.bf16.msra.mxu0 %v585
    %691 = vmatprep.subr.bf16.mxu0 %v590
    %692 = vmatpush1.bf16.msra.mxu0 %v589
    %693 = vmatprep.subr.bf16.mxu0 0
    %694 = vmatpush1.bf16.msra.mxu0 0
    %695 = vmatprep.subr.bf16.mxu0 0
    %696 = vmatpush1.bf16.msra.mxu0 0
    %697 = vmatprep.subr.bf16.mxu0 0
    %698 = vmatpush1.bf16.msra.mxu0 0
    %699 = vmatprep.subr.bf16.mxu0 0
    %700 = vmatpush1.bf16.msra.mxu0 0
    %701 = vmatprep.subr.bf16.mxu0 0
    %702 = vmatpush1.bf16.msra.mxu0 0
    %703 = vmatprep.subr.bf16.mxu0 0
    %704 = vmatpush1.bf16.msra.mxu0 0
    %705 = vmatprep.subr.bf16.mxu0 0
    %706 = vmatpush1.bf16.msra.mxu0 0
    %707 = vmatprep.subr.bf16.mxu0 0
    %708 = vmatpush1.bf16.msra.mxu0 0
    %709 = vmatprep.subr.bf16.mxu0 0
    %710 = vmatpush1.bf16.msra.mxu0 0
    %711 = vmatprep.subr.bf16.mxu0 0
    %712 = vmatpush1.bf16.msra.mxu0 0
    %713 = vmatprep.subr.bf16.mxu0 0
    %714 = vmatpush1.bf16.msra.mxu0 0
    %715 = vmatprep.subr.bf16.mxu0 0
    %716 = vmatpush1.bf16.msra.mxu0 0
    %717 = vmatprep.mubr.bf16.mxu0 0
    %718 = vmatmul.mubr.bf16.gmra.mrb[0].mxu0 %v627
    %v719 = vpop.f32.mrb[0].mxu0
    %v720 = vadd.f32 %v598, %v719
    %v721 = vpop.f32.mrb[0].mxu0
    %v722 = vadd.f32 %v598, %v721
    %v723 = vpop.f32.mrb[0].mxu0
    %v724 = vadd.f32 %v603, %v723
    %v725 = vpop.f32.mrb[0].mxu0
    %v726 = vadd.f32 %v603, %v725
    %727 = vmatprep.mubr.bf16.mxu0 0
    %728 = vmatmul.mubr.bf16.gmra.mrb[0].mxu0 %v630
    %v729 = vpop.f32.mrb[0].mxu0
    %v730 = vadd.f32 %v608, %v729
    %v731 = vpop.f32.mrb[0].mxu0
    %v732 = vadd.f32 %v608, %v731
    %v733 = vpop.f32.mrb[0].mxu0
    %v734 = vadd.f32 %v613, %v733
    %v735 = vpop.f32.mrb[0].mxu0
    %v736 = vadd.f32 %v613, %v735
    %737 = vdwg.mxu0
    %v738 = vmax.f32 %v667, 0.0
    %v739 = vmax.f32 %v669, 0.0
    %v740 = vmax.f32 %v720, 0.0
    %v741 = vmax.f32 %v722, 0.0
    %v742 = vmax.f32 %v671, 0.0
    %v743 = vmax.f32 %v673, 0.0
    %v744 = vmax.f32 %v724, 0.0
    %v745 = vmax.f32 %v726, 0.0
    %v746 = vmax.f32 %v677, 0.0
    %v747 = vmax.f32 %v679, 0.0
    %v748 = vmax.f32 %v730, 0.0
    %v749 = vmax.f32 %v732, 0.0
    %v750 = vmax.f32 %v681, 0.0
    %v751 = vmax.f32 %v683, 0.0
    %v752 = vmax.f32 %v734, 0.0
    %v753 = vmax.f32 %v736, 0.0
    %v754 = vld [vmem:[#allocation12] sm:$0xff]
    %v755 = vld [vmem:[#allocation12 + $0x8] sm:$0xff]
    %v756 = vld [vmem:[#allocation12 + $0x10] sm:$0xff]
    %v757 = vld [vmem:[#allocation12 + $0x18] sm:$0xff]
    %759 = vset.pattern.permute.xlu0 0
    %760 = vperm.xlu0 %759, %v754
    %v761 = vpop.permute.xlu0 %760
    %764 = vset.pattern.permute.xlu0 0
    %765 = vperm.xlu0 %764, %v755
    %v766 = vpop.permute.xlu0 %765
    %769 = vset.pattern.permute.xlu0 0
    %770 = vperm.xlu0 %769, %v756
    %v771 = vpop.permute.xlu0 %770
    %774 = vset.pattern.permute.xlu0 0
    %775 = vperm.xlu0 %774, %v757
    %v776 = vpop.permute.xlu0 %775
    %v778 = vmul.f32 %v761, %v738
    %v779 = vmul.f32 %v761, %v739
    %v780 = vmul.f32 %v761, %v740
    %v781 = vmul.f32 %v761, %v741
    %v782 = vmul.f32 %v766, %v742
    %v783 = vmul.f32 %v766, %v743
    %v784 = vmul.f32 %v766, %v744
    %v785 = vmul.f32 %v766, %v745
    %v786 = vmul.f32 %v771, %v746
    %v787 = vmul.f32 %v771, %v747
    %v788 = vmul.f32 %v771, %v748
    %v789 = vmul.f32 %v771, %v749
    %v790 = vmul.f32 %v776, %v750
    %v791 = vmul.f32 %v776, %v751
    %v792 = vmul.f32 %v776, %v752
    %v793 = vmul.f32 %v776, %v753
    %v794 = vadd.f32 %v778, %v782
    %v795 = vadd.f32 %v794, %v786
    %v796 = vadd.f32 %v795, %v790
    %v797 = vrot.slane %v796, 4
    %v798 = vadd.f32 %v796, %v797
    %v799 = vrot.slane %v798, 2
    %v800 = vadd.f32 %v798, %v799
    %v801 = vrot.slane %v800, 1
    %v802 = vadd.f32 %v800, %v801
    %v803 = vadd.f32 %v779, %v783
    %v804 = vadd.f32 %v803, %v787
    %v805 = vadd.f32 %v804, %v791
    %v806 = vrot.slane %v805, 4
    %v807 = vadd.f32 %v805, %v806
    %v808 = vrot.slane %v807, 2
    %v809 = vadd.f32 %v807, %v808
    %v810 = vrot.slane %v809, 1
    %v811 = vadd.f32 %v809, %v810
    %v812 = vadd.f32 %v780, %v784
    %v813 = vadd.f32 %v812, %v788
    %v814 = vadd.f32 %v813, %v792
    %v815 = vrot.slane %v814, 4
    %v816 = vadd.f32 %v814, %v815
    %v817 = vrot.slane %v816, 2
    %v818 = vadd.f32 %v816, %v817
    %v819 = vrot.slane %v818, 1
    %v820 = vadd.f32 %v818, %v819
    %v821 = vadd.f32 %v781, %v785
    %v822 = vadd.f32 %v821, %v789
    %v823 = vadd.f32 %v822, %v793
    %v824 = vrot.slane %v823, 4
    %v825 = vadd.f32 %v823, %v824
    %v826 = vrot.slane %v825, 2
    %v827 = vadd.f32 %v825, %v826
    %v828 = vrot.slane %v827, 1
    %v829 = vadd.f32 %v827, %v828
    %v830 = vld [vmem:[#allocation2] sm:$0x1]
    %832 = vset.pattern.permute.xlu0 0
    %833 = vperm.xlu0 %832, %v830
    %v834 = vpop.permute.xlu0 %833
    %v836 = vlaneseq
    %v837 = vshrl.u32 %v836, 7
    %v838 = vsub.s32 0, %v837
    %v839 = vrot.slane %v834, %v838
    %v840 = vadd.f32 %v802, %v839
    %v841 = vadd.f32 %v811, %v839
    %v842 = vadd.f32 %v820, %v839
    %v843 = vadd.f32 %v829, %v839
    %v844 = vxor.u32 %v840, 2147483648
    %v845 = vxor.u32 %v841, 2147483648
    %v846 = vxor.u32 %v842, 2147483648
    %v847 = vxor.u32 %v843, 2147483648
    %v848 = vmul.f32 %v844, 1.442695
    %v849 = vpow.pop %v848
    %v850 = vmul.f32 %v845, 1.442695
    %v851 = vpow.pop %v850
    %v852 = vmul.f32 %v846, 1.442695
    %v853 = vpow.pop %v852
    %v854 = vmul.f32 %v847, 1.442695
    %v855 = vpow.pop %v854
    %v856 = vadd.f32 %v849, 1.0
    %v857 = vadd.f32 %v851, 1.0
    %v858 = vadd.f32 %v853, 1.0
    %v859 = vadd.f32 %v855, 1.0
    %v860 = vrcp.pop %v856
    %v861 = vmul.f32 1.0, %v860
    %v862 = vrcp.pop %v857
    %v863 = vmul.f32 1.0, %v862
    %v864 = vrcp.pop %v858
    %v865 = vmul.f32 1.0, %v864
    %v866 = vrcp.pop %v859
    %v867 = vmul.f32 1.0, %v866
    %v872 = vcombine.low %v861, %v863
    %v873 = vcombine.low %v865, %v867
    %v875 = vunpack.c.l.s4 1966171168
    %v876 = vunpack.c.0.s8 %v875
    %v877 = vlaneseq
    %v878 = vshrl.u32 %v877, 7
    %v879 = vsub.s32 %v876, %v878
    %v880 = vrot.slane %v872, %v879
    %v882 = vunpack.c.l.s4 1966171168
    %v883 = vunpack.c.0.s8 %v882
    %v884 = vlaneseq
    %v885 = vshrl.u32 %v884, 7
    %v886 = vsub.s32 %v883, %v885
    %v887 = vrot.slane %v873, %v886
    %v888 = vcombine.low %v880, %v887
    %v890 = vunpack.c.l.s4 1966171168
    %v891 = vunpack.c.0.s8 %v890
    %v892 = vlaneseq
    %v893 = vshrl.u32 %v892, 7
    %v894 = vsub.s32 %v891, %v893
    %v895 = vrot.slane %v888, %v894
    %v897 = vlaneseq
    %vm898 = vcmp.ge.s32.totalorder %v897, 0
    %vm899 = vcmp.lt.s32.totalorder %v897, 512
    %vm900 = vmand %vm898, %vm899
    %901 = vst.msk [vmem:[#allocation14] sm:$0xf] %vm900, %v895
    // Predicated region
    $region54: #{tpu_custom_call.1} parent=1 // pred_check
      _
    $region55: #{tpu_custom_call.1} parent=1 // pred_check_branch
      %903 = sbr.rel (0) target = $region57
    $region56: #{tpu_custom_call.1} parent=1 // pred_region
      %s905 = ssub.s32 64, 64
      %906 = vsyncadd [#allocation5], %s905
      %s908 = sshll.u32 [#allocation14], 4
      %s909 = int_to_ptr.vmem [resolvable:$true] %s908
      %911 = dma.vmem_to_hbm [thread:$0]  %s909, 64, %s7, [#allocation5]
    $region57: #{tpu_custom_call.1} parent=1 // pred_fallthru
      _
    // Predicated region
    $region58: #{tpu_custom_call.1} parent=1 // pred_check
      _
    $region59: #{tpu_custom_call.1} parent=1 // pred_check_branch
      %913 = sbr.rel (0) target = $region61
    $region60: #{tpu_custom_call.1} parent=1 // pred_region
      %914 = dma.done [#allocation5], 64
    $region61: #{tpu_custom_call.1} parent=1 // pred_fallthru
      _
    %915 = vsyncpa [#allocation4], 1
    %916 = vsyncpa [#allocation7], 1
    %917 = vsyncpa [#allocation10], 1
    %918 = vsyncpa [#allocation13], 1
    %919 = vsyncpa [#allocation5], 1

</llo_original>
